<compile_context>
chip_gen: v5e
topology: v5e:2x2
jax: 0.10.0
libtpu: 0.0.40
codegen_flags: <defaults>
</compile_context>

<pallas_src>
import functools

import jax
import jax.numpy as jnp
from jax import lax
from jax.experimental import pallas as pl
from jax.experimental.pallas import tpu as pltpu


def model_ias_kernel(emb_ref, len_ref,
                     wih_f_ref, whh_f_ref, b_f_ref,
                     wih_b_ref, whh_b_ref, b_b_ref,
                     w_slot_f_ref, w_slot_b_ref, b_slot_ref,
                     w_int_f_ref, w_int_b_ref, b_int_ref,
                     slots_ref, intent_ref,
                     xproj_f, xproj_b, hf_all, hb_all,
                     *, T, B, H):
    lens = len_ref[...]                                   # (B, 1) int32

    # ---- hoisted input projections: one lane-dense MXU call per direction,
    # gate biases (b_ih + b_hh) folded in here so the inner loop has no
    # per-step bias broadcast.
    x_all = emb_ref[...]                                  # (T*B, E)
    xproj_f[...] = (jnp.dot(x_all, wih_f_ref[...],
                            preferred_element_type=jnp.float32)
                    + b_f_ref[...])                       # (T*B, 4H)
    xproj_b[...] = (jnp.dot(x_all, wih_b_ref[...],
                            preferred_element_type=jnp.float32)
                    + b_b_ref[...])

    whh_f = whh_f_ref[...]                                # (H, 4H)
    whh_b = whh_b_ref[...]

    def cell(xproj_t, h, c, whh):
        # Single fused-gate matmul per step: (B,H) @ (H,4H) -> (B,4H=128).
        gates = xproj_t + jnp.dot(h, whh, preferred_element_type=jnp.float32)
        i = jax.nn.sigmoid(gates[:, 0 * H:1 * H])
        f = jax.nn.sigmoid(gates[:, 1 * H:2 * H])
        g = jnp.tanh(gates[:, 2 * H:3 * H])
        o = jax.nn.sigmoid(gates[:, 3 * H:4 * H])
        c_new = f * c + i * g
        h_new = o * jnp.tanh(c_new)
        return h_new, c_new

    h0 = jnp.zeros((B, H), jnp.float32)
    c0 = jnp.zeros((B, H), jnp.float32)

    # ---- fused bidirectional recurrence, fully unrolled (T is small, static).
    def step(k, carry):
        hf, cf, hb, cb = carry

        # forward direction: time t = k
        idx_f = pl.multiple_of(k * B, B)
        xf = xproj_f[pl.ds(idx_f, B), :]                  # (B, 4H)
        hf_new, cf_new = cell(xf, hf, cf, whh_f)
        valid_f = k < lens                                # (B, 1)
        # padded positions produce zero outputs (pad_packed_sequence)
        hf_all[pl.ds(idx_f, B), :] = jnp.where(valid_f, hf_new, 0.0)
        # state freezes after the last valid token -> final h == h at len-1
        hf = jnp.where(valid_f, hf_new, hf)
        cf = jnp.where(valid_f, cf_new, cf)

        # backward direction: time t = T-1-k (masking makes it start at the
        # true last token of each sequence, matching packed-sequence reverse).
        tb = T - 1 - k
        idx_b = pl.multiple_of(tb * B, B)
        xb = xproj_b[pl.ds(idx_b, B), :]
        hb_new, cb_new = cell(xb, hb, cb, whh_b)
        valid_b = tb < lens
        hb_all[pl.ds(idx_b, B), :] = jnp.where(valid_b, hb_new, 0.0)
        hb = jnp.where(valid_b, hb_new, hb)
        cb = jnp.where(valid_b, cb_new, cb)

        return hf, cf, hb, cb

    hf_last, _, hb_last, _ = lax.fori_loop(0, T, step, (h0, c0, h0, c0),
                                           unroll=True)

    # ---- slot head: one batched matmul per direction over all timesteps,
    # one bulk (T*B, S) store.  cat(h_f, h_b) @ W == h_f@W_f + h_b@W_b.
    slots_ref[...] = (
        jnp.dot(hf_all[...], w_slot_f_ref[...],
                preferred_element_type=jnp.float32)
        + jnp.dot(hb_all[...], w_slot_b_ref[...],
                  preferred_element_type=jnp.float32)
        + b_slot_ref[...])

    # ---- intent head: cat(last_hidden[-2], last_hidden[-1]) -> Linear,
    # concat-free via split weights.
    intent_ref[...] = (
        jnp.dot(hf_last, w_int_f_ref[...], preferred_element_type=jnp.float32)
        + jnp.dot(hb_last, w_int_b_ref[...], preferred_element_type=jnp.float32)
        + b_int_ref[...])


def model_ias_forward(params, utterance, seq_lengths):
    # Embedding lookup is glue (gather); everything else runs in the kernel.
    emb = params["embedding"][utterance]                  # (B, T, E)
    B, T, E = emb.shape
    H = params["whh_f"].shape[0]
    S = params["w_slot_f"].shape[1]
    I = params["w_int_f"].shape[1]

    # time-major, flattened to (T*B, E) so the kernel only does 2-D matmuls
    emb_flat = jnp.transpose(emb, (1, 0, 2)).reshape(T * B, E)
    emb_flat = emb_flat.astype(jnp.float32)
    lens = seq_lengths.astype(jnp.int32).reshape(B, 1)

    kernel = functools.partial(model_ias_kernel, T=T, B=B, H=H)
    vmem = pl.BlockSpec(memory_space=pltpu.MemorySpace.VMEM)

    # advisory cost estimate for XLA scheduling around the custom call
    flops = (2 * 2 * T * B * E * 4 * H          # hoisted input projections
             + 2 * 2 * T * B * H * 4 * H        # recurrent h@Whh matmuls
             + 2 * T * B * 2 * H * S            # slot head
             + 2 * B * 2 * H * I)               # intent head
    transcendentals = 2 * T * B * 5 * H         # 3 sigmoid + 2 tanh per dir
    weight_bytes = 4 * sum(int(params[k].size) for k in params
                           if k != "embedding")
    bytes_accessed = (4 * emb_flat.size + 4 * T * B * S + 4 * B * I
                      + 4 * B + weight_bytes)

    slots_flat, intent = pl.pallas_call(
        kernel,
        out_shape=(jax.ShapeDtypeStruct((T * B, S), jnp.float32),
                   jax.ShapeDtypeStruct((B, I), jnp.float32)),
        in_specs=[vmem] * 14,
        out_specs=(vmem, vmem),
        scratch_shapes=[pltpu.VMEM((T * B, 4 * H), jnp.float32),   # xproj_f
                        pltpu.VMEM((T * B, 4 * H), jnp.float32),   # xproj_b
                        pltpu.VMEM((T * B, H), jnp.float32),       # hf_all
                        pltpu.VMEM((T * B, H), jnp.float32)],      # hb_all
        cost_estimate=pl.CostEstimate(flops=flops,
                                      transcendentals=transcendentals,
                                      bytes_accessed=bytes_accessed),
    )(emb_flat, lens,
      params["wih_f"], params["whh_f"], params["b_f"],
      params["wih_b"], params["whh_b"], params["b_b"],
      params["w_slot_f"], params["w_slot_b"], params["b_slot"],
      params["w_int_f"], params["w_int_b"], params["b_int"])

    # (T*B, S) -> (T, B, S) -> slots.permute(0, 2, 1) == (B, S, T)
    slots = jnp.transpose(slots_flat.reshape(T, B, S), (1, 2, 0))
    return slots, intent


if __name__ == "__main__":
    # Small shapes consistent with the module's forward.
    vocab_len, emb_size, hid_size = 50, 32, 32
    out_slot, out_int = 16, 8
    B, T = 2, 8

    key = jax.random.PRNGKey(0)
    keys = jax.random.split(key, 14)

    def u(k, shape, scale=0.1):
        return jax.random.uniform(k, shape, jnp.float32, -scale, scale)

    emb_table = u(keys[0], (vocab_len, emb_size))
    emb_table = emb_table.at[0].set(0.0)  # nn.Embedding padding_idx=0 row zero

    params = dict(
        embedding=emb_table,
        # fused-gate LSTM weights, lanes = [i | f | g | o] (PyTorch order),
        # pre-transposed so 4H = 128 fills the lane dimension exactly.
        wih_f=u(keys[1], (emb_size, 4 * hid_size)),
        whh_f=u(keys[2], (hid_size, 4 * hid_size)),
        b_f=u(keys[3], (1, 4 * hid_size)),            # b_ih + b_hh combined
        wih_b=u(keys[4], (emb_size, 4 * hid_size)),
        whh_b=u(keys[5], (hid_size, 4 * hid_size)),
        b_b=u(keys[6], (1, 4 * hid_size)),
        # heads split per direction so the kernel never concatenates on lanes
        w_slot_f=u(keys[7], (hid_size, out_slot)),
        w_slot_b=u(keys[8], (hid_size, out_slot)),
        b_slot=u(keys[9], (1, out_slot)),
        w_int_f=u(keys[10], (hid_size, out_int)),
        w_int_b=u(keys[11], (hid_size, out_int)),
        b_int=u(keys[12], (1, out_int)),
    )

    # pack_padded_sequence(enforce_sorted=True) expects descending lengths.
    seq_lengths = jnp.array([8, 5], dtype=jnp.int32)
    tok = jax.random.randint(keys[13], (B, T), 1, vocab_len)
    pos = jnp.arange(T)[None, :]
    utterance = jnp.where(pos < seq_lengths[:, None], tok, 0)

    slots, intent = jax.jit(model_ias_forward)(params, utterance, seq_lengths)
    jax.block_until_ready((slots, intent))

    assert slots.shape == (B, out_slot, T), slots.shape
    assert intent.shape == (B, out_int), intent.shape
    print("KERNEL_OK")
</pallas_src>

<mosaic_0001>
module attributes {stable_mosaic.version = 11 : i64} {
  func.func @model_ias_kernel(%arg0: memref<16x32xf32, #tpu.memory_space<vmem>>, %arg1: memref<2x1xi32, #tpu.memory_space<vmem>>, %arg2: memref<32x128xf32, #tpu.memory_space<vmem>>, %arg3: memref<32x128xf32, #tpu.memory_space<vmem>>, %arg4: memref<1x128xf32, #tpu.memory_space<vmem>>, %arg5: memref<32x128xf32, #tpu.memory_space<vmem>>, %arg6: memref<32x128xf32, #tpu.memory_space<vmem>>, %arg7: memref<1x128xf32, #tpu.memory_space<vmem>>, %arg8: memref<32x16xf32, #tpu.memory_space<vmem>>, %arg9: memref<32x16xf32, #tpu.memory_space<vmem>>, %arg10: memref<1x16xf32, #tpu.memory_space<vmem>>, %arg11: memref<32x8xf32, #tpu.memory_space<vmem>>, %arg12: memref<32x8xf32, #tpu.memory_space<vmem>>, %arg13: memref<1x8xf32, #tpu.memory_space<vmem>>, %arg14: memref<16x16xf32, #tpu.memory_space<vmem>>, %arg15: memref<2x8xf32, #tpu.memory_space<vmem>>, %arg16: memref<16x128xf32, #tpu.memory_space<vmem>>, %arg17: memref<16x128xf32, #tpu.memory_space<vmem>>, %arg18: memref<16x32xf32, #tpu.memory_space<vmem>>, %arg19: memref<16x32xf32, #tpu.memory_space<vmem>>) attributes {dimension_semantics = [], scalar_prefetch = 0 : i64, scratch_operands = 4 : i64, tpu.core_type = #tpu.core_type<tc>} {
    %c0 = arith.constant 0 : index
    %c0_0 = arith.constant 0 : index
    %0 = vector.load %arg1[%c0, %c0_0] : memref<2x1xi32, #tpu.memory_space<vmem>>, vector<2x1xi32>
    %c0_1 = arith.constant 0 : index
    %c0_2 = arith.constant 0 : index
    %1 = vector.load %arg0[%c0_1, %c0_2] : memref<16x32xf32, #tpu.memory_space<vmem>>, vector<16x32xf32>
    %c0_3 = arith.constant 0 : index
    %c0_4 = arith.constant 0 : index
    %2 = vector.load %arg2[%c0_3, %c0_4] : memref<32x128xf32, #tpu.memory_space<vmem>>, vector<32x128xf32>
    %cst = arith.constant dense<0.000000e+00> : vector<16x128xf32>
    %3 = tpu.matmul %1, %2, %cst {dimension_numbers = #tpu.dot_dimension_numbers<[1], [0], [0], [1], [0, 0, 1, 1], [], []>} : vector<16x32xf32>, vector<32x128xf32>, vector<16x128xf32> -> vector<16x128xf32>
    %c0_5 = arith.constant 0 : index
    %c0_6 = arith.constant 0 : index
    %4 = vector.load %arg4[%c0_5, %c0_6] : memref<1x128xf32, #tpu.memory_space<vmem>>, vector<1x128xf32>
    %5 = vector.broadcast %4 : vector<1x128xf32> to vector<16x128xf32>
    %6 = arith.addf %3, %5 : vector<16x128xf32>
    %c0_7 = arith.constant 0 : index
    %c0_8 = arith.constant 0 : index
    %7 = vector.load %arg16[%c0_7, %c0_8] : memref<16x128xf32, #tpu.memory_space<vmem>>, vector<16x128xf32>
    tpu.vector_store %arg16[%c0_7, %c0_8], %6 {strides = array<i32>} : memref<16x128xf32, #tpu.memory_space<vmem>>, vector<16x128xf32>,
    %c0_9 = arith.constant 0 : index
    %c0_10 = arith.constant 0 : index
    %8 = vector.load %arg5[%c0_9, %c0_10] : memref<32x128xf32, #tpu.memory_space<vmem>>, vector<32x128xf32>
    %cst_11 = arith.constant dense<0.000000e+00> : vector<16x128xf32>
    %9 = tpu.matmul %1, %8, %cst_11 {dimension_numbers = #tpu.dot_dimension_numbers<[1], [0], [0], [1], [0, 0, 1, 1], [], []>} : vector<16x32xf32>, vector<32x128xf32>, vector<16x128xf32> -> vector<16x128xf32>
    %c0_12 = arith.constant 0 : index
    %c0_13 = arith.constant 0 : index
    %10 = vector.load %arg7[%c0_12, %c0_13] : memref<1x128xf32, #tpu.memory_space<vmem>>, vector<1x128xf32>
    %11 = vector.broadcast %10 : vector<1x128xf32> to vector<16x128xf32>
    %12 = arith.addf %9, %11 : vector<16x128xf32>
    %c0_14 = arith.constant 0 : index
    %c0_15 = arith.constant 0 : index
    %13 = vector.load %arg17[%c0_14, %c0_15] : memref<16x128xf32, #tpu.memory_space<vmem>>, vector<16x128xf32>
    tpu.vector_store %arg17[%c0_14, %c0_15], %12 {strides = array<i32>} : memref<16x128xf32, #tpu.memory_space<vmem>>, vector<16x128xf32>,
    %c0_16 = arith.constant 0 : index
    %c0_17 = arith.constant 0 : index
    %14 = vector.load %arg3[%c0_16, %c0_17] : memref<32x128xf32, #tpu.memory_space<vmem>>, vector<32x128xf32>
    %c0_18 = arith.constant 0 : index
    %c0_19 = arith.constant 0 : index
    %15 = vector.load %arg6[%c0_18, %c0_19] : memref<32x128xf32, #tpu.memory_space<vmem>>, vector<32x128xf32>
    %cst_20 = arith.constant 0.000000e+00 : f32
    %16 = vector.broadcast %cst_20 : f32 to vector<2x32xf32>
    %cst_21 = arith.constant 0.000000e+00 : f32
    %17 = vector.broadcast %cst_21 : f32 to vector<2x32xf32>
    %c0_i32 = arith.constant 0 : i32
    %c2_i32 = arith.constant 2 : i32
    %18 = arith.muli %c0_i32, %c2_i32 : i32
    %19 = tpu.assume_multiple %18, 2 : i32
    %20 = arith.index_cast %19 : i32 to index
    %c0_22 = arith.constant 0 : index
    %21 = vector.load %arg16[%20, %c0_22] : memref<16x128xf32, #tpu.memory_space<vmem>>, vector<2x128xf32>
    %cst_23 = arith.constant dense<0.000000e+00> : vector<2x128xf32>
    %22 = tpu.matmul %16, %14, %cst_23 {dimension_numbers = #tpu.dot_dimension_numbers<[1], [0], [0], [1], [0, 0, 1, 1], [], []>} : vector<2x32xf32>, vector<32x128xf32>, vector<2x128xf32> -> vector<2x128xf32>
    %23 = arith.addf %21, %22 : vector<2x128xf32>
    %24 = vector.extract_strided_slice %23 {offsets = [0, 0], sizes = [2, 32], strides = [1, 1]} : vector<2x128xf32> to vector<2x32xf32>
    %25 = arith.negf %24 : vector<2x32xf32>
    %26 = math.exp %25 : vector<2x32xf32>
    %cst_24 = arith.constant 1.000000e+00 : f32
    %27 = vector.broadcast %cst_24 : f32 to vector<2x32xf32>
    %28 = arith.addf %27, %26 : vector<2x32xf32>
    %29 = arith.divf %27, %28 : vector<2x32xf32>
    %30 = vector.extract_strided_slice %23 {offsets = [0, 32], sizes = [2, 32], strides = [1, 1]} : vector<2x128xf32> to vector<2x32xf32>
    %31 = arith.negf %30 : vector<2x32xf32>
    %32 = math.exp %31 : vector<2x32xf32>
    %cst_25 = arith.constant 1.000000e+00 : f32
    %33 = vector.broadcast %cst_25 : f32 to vector<2x32xf32>
    %34 = arith.addf %33, %32 : vector<2x32xf32>
    %35 = arith.divf %33, %34 : vector<2x32xf32>
    %36 = vector.extract_strided_slice %23 {offsets = [0, 64], sizes = [2, 32], strides = [1, 1]} : vector<2x128xf32> to vector<2x32xf32>
    %37 = math.tanh %36 : vector<2x32xf32>
    %38 = vector.extract_strided_slice %23 {offsets = [0, 96], sizes = [2, 32], strides = [1, 1]} : vector<2x128xf32> to vector<2x32xf32>
    %39 = arith.negf %38 : vector<2x32xf32>
    %40 = math.exp %39 : vector<2x32xf32>
    %cst_26 = arith.constant 1.000000e+00 : f32
    %41 = vector.broadcast %cst_26 : f32 to vector<2x32xf32>
    %42 = arith.addf %41, %40 : vector<2x32xf32>
    %43 = arith.divf %41, %42 : vector<2x32xf32>
    %44 = arith.mulf %35, %17 : vector<2x32xf32>
    %45 = arith.mulf %29, %37 : vector<2x32xf32>
    %46 = arith.addf %44, %45 : vector<2x32xf32>
    %47 = math.tanh %46 : vector<2x32xf32>
    %48 = arith.mulf %43, %47 : vector<2x32xf32>
    %49 = vector.broadcast %c0_i32 : i32 to vector<2x1xi32>
    %50 = arith.cmpi slt, %49, %0 : vector<2x1xi32>
    %cst_27 = arith.constant 0.000000e+00 : f32
    %51 = vector.shape_cast %50 : vector<2x1xi1> to vector<2x1xi1>
    %52 = vector.broadcast %51 : vector<2x1xi1> to vector<2x32xi1>
    %53 = vector.broadcast %cst_27 : f32 to vector<2x32xf32>
    %54 = arith.select %52, %48, %53 : vector<2x32xi1>, vector<2x32xf32>
    %55 = arith.index_cast %19 : i32 to index
    %c0_28 = arith.constant 0 : index
    %56 = vector.load %arg18[%55, %c0_28] : memref<16x32xf32, #tpu.memory_space<vmem>>, vector<2x32xf32>
    tpu.vector_store %arg18[%55, %c0_28], %54 {strides = array<i32>} : memref<16x32xf32, #tpu.memory_space<vmem>>, vector<2x32xf32>,
    %57 = vector.shape_cast %50 : vector<2x1xi1> to vector<2x1xi1>
    %58 = vector.broadcast %57 : vector<2x1xi1> to vector<2x32xi1>
    %59 = arith.select %58, %48, %16 : vector<2x32xi1>, vector<2x32xf32>
    %60 = vector.shape_cast %50 : vector<2x1xi1> to vector<2x1xi1>
    %61 = vector.broadcast %60 : vector<2x1xi1> to vector<2x32xi1>
    %62 = arith.select %61, %46, %17 : vector<2x32xi1>, vector<2x32xf32>
    %c7_i32 = arith.constant 7 : i32
    %63 = arith.subi %c7_i32, %c0_i32 : i32
    %c2_i32_29 = arith.constant 2 : i32
    %64 = arith.muli %63, %c2_i32_29 : i32
    %65 = tpu.assume_multiple %64, 2 : i32
    %66 = arith.index_cast %65 : i32 to index
    %c0_30 = arith.constant 0 : index
    %67 = vector.load %arg17[%66, %c0_30] : memref<16x128xf32, #tpu.memory_space<vmem>>, vector<2x128xf32>
    %cst_31 = arith.constant dense<0.000000e+00> : vector<2x128xf32>
    %68 = tpu.matmul %16, %15, %cst_31 {dimension_numbers = #tpu.dot_dimension_numbers<[1], [0], [0], [1], [0, 0, 1, 1], [], []>} : vector<2x32xf32>, vector<32x128xf32>, vector<2x128xf32> -> vector<2x128xf32>
    %69 = arith.addf %67, %68 : vector<2x128xf32>
    %70 = vector.extract_strided_slice %69 {offsets = [0, 0], sizes = [2, 32], strides = [1, 1]} : vector<2x128xf32> to vector<2x32xf32>
    %71 = arith.negf %70 : vector<2x32xf32>
    %72 = math.exp %71 : vector<2x32xf32>
    %cst_32 = arith.constant 1.000000e+00 : f32
    %73 = vector.broadcast %cst_32 : f32 to vector<2x32xf32>
    %74 = arith.addf %73, %72 : vector<2x32xf32>
    %75 = arith.divf %73, %74 : vector<2x32xf32>
    %76 = vector.extract_strided_slice %69 {offsets = [0, 32], sizes = [2, 32], strides = [1, 1]} : vector<2x128xf32> to vector<2x32xf32>
    %77 = arith.negf %76 : vector<2x32xf32>
    %78 = math.exp %77 : vector<2x32xf32>
    %cst_33 = arith.constant 1.000000e+00 : f32
    %79 = vector.broadcast %cst_33 : f32 to vector<2x32xf32>
    %80 = arith.addf %79, %78 : vector<2x32xf32>
    %81 = arith.divf %79, %80 : vector<2x32xf32>
    %82 = vector.extract_strided_slice %69 {offsets = [0, 64], sizes = [2, 32], strides = [1, 1]} : vector<2x128xf32> to vector<2x32xf32>
    %83 = math.tanh %82 : vector<2x32xf32>
    %84 = vector.extract_strided_slice %69 {offsets = [0, 96], sizes = [2, 32], strides = [1, 1]} : vector<2x128xf32> to vector<2x32xf32>
    %85 = arith.negf %84 : vector<2x32xf32>
    %86 = math.exp %85 : vector<2x32xf32>
    %cst_34 = arith.constant 1.000000e+00 : f32
    %87 = vector.broadcast %cst_34 : f32 to vector<2x32xf32>
    %88 = arith.addf %87, %86 : vector<2x32xf32>
    %89 = arith.divf %87, %88 : vector<2x32xf32>
    %90 = arith.mulf %81, %17 : vector<2x32xf32>
    %91 = arith.mulf %75, %83 : vector<2x32xf32>
    %92 = arith.addf %90, %91 : vector<2x32xf32>
    %93 = math.tanh %92 : vector<2x32xf32>
    %94 = arith.mulf %89, %93 : vector<2x32xf32>
    %95 = vector.broadcast %63 : i32 to vector<2x1xi32>
    %96 = arith.cmpi slt, %95, %0 : vector<2x1xi32>
    %cst_35 = arith.constant 0.000000e+00 : f32
    %97 = vector.shape_cast %96 : vector<2x1xi1> to vector<2x1xi1>
    %98 = vector.broadcast %97 : vector<2x1xi1> to vector<2x32xi1>
    %99 = vector.broadcast %cst_35 : f32 to vector<2x32xf32>
    %100 = arith.select %98, %94, %99 : vector<2x32xi1>, vector<2x32xf32>
    %101 = arith.index_cast %65 : i32 to index
    %c0_36 = arith.constant 0 : index
    %102 = vector.load %arg19[%101, %c0_36] : memref<16x32xf32, #tpu.memory_space<vmem>>, vector<2x32xf32>
    tpu.vector_store %arg19[%101, %c0_36], %100 {strides = array<i32>} : memref<16x32xf32, #tpu.memory_space<vmem>>, vector<2x32xf32>,
    %103 = vector.shape_cast %96 : vector<2x1xi1> to vector<2x1xi1>
    %104 = vector.broadcast %103 : vector<2x1xi1> to vector<2x32xi1>
    %105 = arith.select %104, %94, %16 : vector<2x32xi1>, vector<2x32xf32>
    %106 = vector.shape_cast %96 : vector<2x1xi1> to vector<2x1xi1>
    %107 = vector.broadcast %106 : vector<2x1xi1> to vector<2x32xi1>
    %108 = arith.select %107, %92, %17 : vector<2x32xi1>, vector<2x32xf32>
    %c1_i32 = arith.constant 1 : i32
    %c2_i32_37 = arith.constant 2 : i32
    %109 = arith.muli %c1_i32, %c2_i32_37 : i32
    %110 = tpu.assume_multiple %109, 2 : i32
    %111 = arith.index_cast %110 : i32 to index
    %c0_38 = arith.constant 0 : index
    %112 = vector.load %arg16[%111, %c0_38] : memref<16x128xf32, #tpu.memory_space<vmem>>, vector<2x128xf32>
    %cst_39 = arith.constant dense<0.000000e+00> : vector<2x128xf32>
    %113 = tpu.matmul %59, %14, %cst_39 {dimension_numbers = #tpu.dot_dimension_numbers<[1], [0], [0], [1], [0, 0, 1, 1], [], []>} : vector<2x32xf32>, vector<32x128xf32>, vector<2x128xf32> -> vector<2x128xf32>
    %114 = arith.addf %112, %113 : vector<2x128xf32>
    %115 = vector.extract_strided_slice %114 {offsets = [0, 0], sizes = [2, 32], strides = [1, 1]} : vector<2x128xf32> to vector<2x32xf32>
    %116 = arith.negf %115 : vector<2x32xf32>
    %117 = math.exp %116 : vector<2x32xf32>
    %cst_40 = arith.constant 1.000000e+00 : f32
    %118 = vector.broadcast %cst_40 : f32 to vector<2x32xf32>
    %119 = arith.addf %118, %117 : vector<2x32xf32>
    %120 = arith.divf %118, %119 : vector<2x32xf32>
    %121 = vector.extract_strided_slice %114 {offsets = [0, 32], sizes = [2, 32], strides = [1, 1]} : vector<2x128xf32> to vector<2x32xf32>
    %122 = arith.negf %121 : vector<2x32xf32>
    %123 = math.exp %122 : vector<2x32xf32>
    %cst_41 = arith.constant 1.000000e+00 : f32
    %124 = vector.broadcast %cst_41 : f32 to vector<2x32xf32>
    %125 = arith.addf %124, %123 : vector<2x32xf32>
    %126 = arith.divf %124, %125 : vector<2x32xf32>
    %127 = vector.extract_strided_slice %114 {offsets = [0, 64], sizes = [2, 32], strides = [1, 1]} : vector<2x128xf32> to vector<2x32xf32>
    %128 = math.tanh %127 : vector<2x32xf32>
    %129 = vector.extract_strided_slice %114 {offsets = [0, 96], sizes = [2, 32], strides = [1, 1]} : vector<2x128xf32> to vector<2x32xf32>
    %130 = arith.negf %129 : vector<2x32xf32>
    %131 = math.exp %130 : vector<2x32xf32>
    %cst_42 = arith.constant 1.000000e+00 : f32
    %132 = vector.broadcast %cst_42 : f32 to vector<2x32xf32>
    %133 = arith.addf %132, %131 : vector<2x32xf32>
    %134 = arith.divf %132, %133 : vector<2x32xf32>
    %135 = arith.mulf %126, %62 : vector<2x32xf32>
    %136 = arith.mulf %120, %128 : vector<2x32xf32>
    %137 = arith.addf %135, %136 : vector<2x32xf32>
    %138 = math.tanh %137 : vector<2x32xf32>
    %139 = arith.mulf %134, %138 : vector<2x32xf32>
    %140 = vector.broadcast %c1_i32 : i32 to vector<2x1xi32>
    %141 = arith.cmpi slt, %140, %0 : vector<2x1xi32>
    %cst_43 = arith.constant 0.000000e+00 : f32
    %142 = vector.shape_cast %141 : vector<2x1xi1> to vector<2x1xi1>
    %143 = vector.broadcast %142 : vector<2x1xi1> to vector<2x32xi1>
    %144 = vector.broadcast %cst_43 : f32 to vector<2x32xf32>
    %145 = arith.select %143, %139, %144 : vector<2x32xi1>, vector<2x32xf32>
    %146 = arith.index_cast %110 : i32 to index
    %c0_44 = arith.constant 0 : index
    %147 = vector.load %arg18[%146, %c0_44] : memref<16x32xf32, #tpu.memory_space<vmem>>, vector<2x32xf32>
    tpu.vector_store %arg18[%146, %c0_44], %145 {strides = array<i32>} : memref<16x32xf32, #tpu.memory_space<vmem>>, vector<2x32xf32>,
    %148 = vector.shape_cast %141 : vector<2x1xi1> to vector<2x1xi1>
    %149 = vector.broadcast %148 : vector<2x1xi1> to vector<2x32xi1>
    %150 = arith.select %149, %139, %59 : vector<2x32xi1>, vector<2x32xf32>
    %151 = vector.shape_cast %141 : vector<2x1xi1> to vector<2x1xi1>
    %152 = vector.broadcast %151 : vector<2x1xi1> to vector<2x32xi1>
    %153 = arith.select %152, %137, %62 : vector<2x32xi1>, vector<2x32xf32>
    %c7_i32_45 = arith.constant 7 : i32
    %154 = arith.subi %c7_i32_45, %c1_i32 : i32
    %c2_i32_46 = arith.constant 2 : i32
    %155 = arith.muli %154, %c2_i32_46 : i32
    %156 = tpu.assume_multiple %155, 2 : i32
    %157 = arith.index_cast %156 : i32 to index
    %c0_47 = arith.constant 0 : index
    %158 = vector.load %arg17[%157, %c0_47] : memref<16x128xf32, #tpu.memory_space<vmem>>, vector<2x128xf32>
    %cst_48 = arith.constant dense<0.000000e+00> : vector<2x128xf32>
    %159 = tpu.matmul %105, %15, %cst_48 {dimension_numbers = #tpu.dot_dimension_numbers<[1], [0], [0], [1], [0, 0, 1, 1], [], []>} : vector<2x32xf32>, vector<32x128xf32>, vector<2x128xf32> -> vector<2x128xf32>
    %160 = arith.addf %158, %159 : vector<2x128xf32>
    %161 = vector.extract_strided_slice %160 {offsets = [0, 0], sizes = [2, 32], strides = [1, 1]} : vector<2x128xf32> to vector<2x32xf32>
    %162 = arith.negf %161 : vector<2x32xf32>
    %163 = math.exp %162 : vector<2x32xf32>
    %cst_49 = arith.constant 1.000000e+00 : f32
    %164 = vector.broadcast %cst_49 : f32 to vector<2x32xf32>
    %165 = arith.addf %164, %163 : vector<2x32xf32>
    %166 = arith.divf %164, %165 : vector<2x32xf32>
    %167 = vector.extract_strided_slice %160 {offsets = [0, 32], sizes = [2, 32], strides = [1, 1]} : vector<2x128xf32> to vector<2x32xf32>
    %168 = arith.negf %167 : vector<2x32xf32>
    %169 = math.exp %168 : vector<2x32xf32>
    %cst_50 = arith.constant 1.000000e+00 : f32
    %170 = vector.broadcast %cst_50 : f32 to vector<2x32xf32>
    %171 = arith.addf %170, %169 : vector<2x32xf32>
    %172 = arith.divf %170, %171 : vector<2x32xf32>
    %173 = vector.extract_strided_slice %160 {offsets = [0, 64], sizes = [2, 32], strides = [1, 1]} : vector<2x128xf32> to vector<2x32xf32>
    %174 = math.tanh %173 : vector<2x32xf32>
    %175 = vector.extract_strided_slice %160 {offsets = [0, 96], sizes = [2, 32], strides = [1, 1]} : vector<2x128xf32> to vector<2x32xf32>
    %176 = arith.negf %175 : vector<2x32xf32>
    %177 = math.exp %176 : vector<2x32xf32>
    %cst_51 = arith.constant 1.000000e+00 : f32
    %178 = vector.broadcast %cst_51 : f32 to vector<2x32xf32>
    %179 = arith.addf %178, %177 : vector<2x32xf32>
    %180 = arith.divf %178, %179 : vector<2x32xf32>
    %181 = arith.mulf %172, %108 : vector<2x32xf32>
    %182 = arith.mulf %166, %174 : vector<2x32xf32>
    %183 = arith.addf %181, %182 : vector<2x32xf32>
    %184 = math.tanh %183 : vector<2x32xf32>
    %185 = arith.mulf %180, %184 : vector<2x32xf32>
    %186 = vector.broadcast %154 : i32 to vector<2x1xi32>
    %187 = arith.cmpi slt, %186, %0 : vector<2x1xi32>
    %cst_52 = arith.constant 0.000000e+00 : f32
    %188 = vector.shape_cast %187 : vector<2x1xi1> to vector<2x1xi1>
    %189 = vector.broadcast %188 : vector<2x1xi1> to vector<2x32xi1>
    %190 = vector.broadcast %cst_52 : f32 to vector<2x32xf32>
    %191 = arith.select %189, %185, %190 : vector<2x32xi1>, vector<2x32xf32>
    %192 = arith.index_cast %156 : i32 to index
    %c0_53 = arith.constant 0 : index
    %193 = vector.load %arg19[%192, %c0_53] : memref<16x32xf32, #tpu.memory_space<vmem>>, vector<2x32xf32>
    tpu.vector_store %arg19[%192, %c0_53], %191 {strides = array<i32>} : memref<16x32xf32, #tpu.memory_space<vmem>>, vector<2x32xf32>,
    %194 = vector.shape_cast %187 : vector<2x1xi1> to vector<2x1xi1>
    %195 = vector.broadcast %194 : vector<2x1xi1> to vector<2x32xi1>
    %196 = arith.select %195, %185, %105 : vector<2x32xi1>, vector<2x32xf32>
    %197 = vector.shape_cast %187 : vector<2x1xi1> to vector<2x1xi1>
    %198 = vector.broadcast %197 : vector<2x1xi1> to vector<2x32xi1>
    %199 = arith.select %198, %183, %108 : vector<2x32xi1>, vector<2x32xf32>
    %c2_i32_54 = arith.constant 2 : i32
    %c2_i32_55 = arith.constant 2 : i32
    %200 = arith.muli %c2_i32_54, %c2_i32_55 : i32
    %201 = tpu.assume_multiple %200, 2 : i32
    %202 = arith.index_cast %201 : i32 to index
    %c0_56 = arith.constant 0 : index
    %203 = vector.load %arg16[%202, %c0_56] : memref<16x128xf32, #tpu.memory_space<vmem>>, vector<2x128xf32>
    %cst_57 = arith.constant dense<0.000000e+00> : vector<2x128xf32>
    %204 = tpu.matmul %150, %14, %cst_57 {dimension_numbers = #tpu.dot_dimension_numbers<[1], [0], [0], [1], [0, 0, 1, 1], [], []>} : vector<2x32xf32>, vector<32x128xf32>, vector<2x128xf32> -> vector<2x128xf32>
    %205 = arith.addf %203, %204 : vector<2x128xf32>
    %206 = vector.extract_strided_slice %205 {offsets = [0, 0], sizes = [2, 32], strides = [1, 1]} : vector<2x128xf32> to vector<2x32xf32>
    %207 = arith.negf %206 : vector<2x32xf32>
    %208 = math.exp %207 : vector<2x32xf32>
    %cst_58 = arith.constant 1.000000e+00 : f32
    %209 = vector.broadcast %cst_58 : f32 to vector<2x32xf32>
    %210 = arith.addf %209, %208 : vector<2x32xf32>
    %211 = arith.divf %209, %210 : vector<2x32xf32>
    %212 = vector.extract_strided_slice %205 {offsets = [0, 32], sizes = [2, 32], strides = [1, 1]} : vector<2x128xf32> to vector<2x32xf32>
    %213 = arith.negf %212 : vector<2x32xf32>
    %214 = math.exp %213 : vector<2x32xf32>
    %cst_59 = arith.constant 1.000000e+00 : f32
    %215 = vector.broadcast %cst_59 : f32 to vector<2x32xf32>
    %216 = arith.addf %215, %214 : vector<2x32xf32>
    %217 = arith.divf %215, %216 : vector<2x32xf32>
    %218 = vector.extract_strided_slice %205 {offsets = [0, 64], sizes = [2, 32], strides = [1, 1]} : vector<2x128xf32> to vector<2x32xf32>
    %219 = math.tanh %218 : vector<2x32xf32>
    %220 = vector.extract_strided_slice %205 {offsets = [0, 96], sizes = [2, 32], strides = [1, 1]} : vector<2x128xf32> to vector<2x32xf32>
    %221 = arith.negf %220 : vector<2x32xf32>
    %222 = math.exp %221 : vector<2x32xf32>
    %cst_60 = arith.constant 1.000000e+00 : f32
    %223 = vector.broadcast %cst_60 : f32 to vector<2x32xf32>
    %224 = arith.addf %223, %222 : vector<2x32xf32>
    %225 = arith.divf %223, %224 : vector<2x32xf32>
    %226 = arith.mulf %217, %153 : vector<2x32xf32>
    %227 = arith.mulf %211, %219 : vector<2x32xf32>
    %228 = arith.addf %226, %227 : vector<2x32xf32>
    %229 = math.tanh %228 : vector<2x32xf32>
    %230 = arith.mulf %225, %229 : vector<2x32xf32>
    %231 = vector.broadcast %c2_i32_54 : i32 to vector<2x1xi32>
    %232 = arith.cmpi slt, %231, %0 : vector<2x1xi32>
    %cst_61 = arith.constant 0.000000e+00 : f32
    %233 = vector.shape_cast %232 : vector<2x1xi1> to vector<2x1xi1>
    %234 = vector.broadcast %233 : vector<2x1xi1> to vector<2x32xi1>
    %235 = vector.broadcast %cst_61 : f32 to vector<2x32xf32>
    %236 = arith.select %234, %230, %235 : vector<2x32xi1>, vector<2x32xf32>
    %237 = arith.index_cast %201 : i32 to index
    %c0_62 = arith.constant 0 : index
    %238 = vector.load %arg18[%237, %c0_62] : memref<16x32xf32, #tpu.memory_space<vmem>>, vector<2x32xf32>
    tpu.vector_store %arg18[%237, %c0_62], %236 {strides = array<i32>} : memref<16x32xf32, #tpu.memory_space<vmem>>, vector<2x32xf32>,
    %239 = vector.shape_cast %232 : vector<2x1xi1> to vector<2x1xi1>
    %240 = vector.broadcast %239 : vector<2x1xi1> to vector<2x32xi1>
    %241 = arith.select %240, %230, %150 : vector<2x32xi1>, vector<2x32xf32>
    %242 = vector.shape_cast %232 : vector<2x1xi1> to vector<2x1xi1>
    %243 = vector.broadcast %242 : vector<2x1xi1> to vector<2x32xi1>
    %244 = arith.select %243, %228, %153 : vector<2x32xi1>, vector<2x32xf32>
    %c7_i32_63 = arith.constant 7 : i32
    %245 = arith.subi %c7_i32_63, %c2_i32_54 : i32
    %c2_i32_64 = arith.constant 2 : i32
    %246 = arith.muli %245, %c2_i32_64 : i32
    %247 = tpu.assume_multiple %246, 2 : i32
    %248 = arith.index_cast %247 : i32 to index
    %c0_65 = arith.constant 0 : index
    %249 = vector.load %arg17[%248, %c0_65] : memref<16x128xf32, #tpu.memory_space<vmem>>, vector<2x128xf32>
    %cst_66 = arith.constant dense<0.000000e+00> : vector<2x128xf32>
    %250 = tpu.matmul %196, %15, %cst_66 {dimension_numbers = #tpu.dot_dimension_numbers<[1], [0], [0], [1], [0, 0, 1, 1], [], []>} : vector<2x32xf32>, vector<32x128xf32>, vector<2x128xf32> -> vector<2x128xf32>
    %251 = arith.addf %249, %250 : vector<2x128xf32>
    %252 = vector.extract_strided_slice %251 {offsets = [0, 0], sizes = [2, 32], strides = [1, 1]} : vector<2x128xf32> to vector<2x32xf32>
    %253 = arith.negf %252 : vector<2x32xf32>
    %254 = math.exp %253 : vector<2x32xf32>
    %cst_67 = arith.constant 1.000000e+00 : f32
    %255 = vector.broadcast %cst_67 : f32 to vector<2x32xf32>
    %256 = arith.addf %255, %254 : vector<2x32xf32>
    %257 = arith.divf %255, %256 : vector<2x32xf32>
    %258 = vector.extract_strided_slice %251 {offsets = [0, 32], sizes = [2, 32], strides = [1, 1]} : vector<2x128xf32> to vector<2x32xf32>
    %259 = arith.negf %258 : vector<2x32xf32>
    %260 = math.exp %259 : vector<2x32xf32>
    %cst_68 = arith.constant 1.000000e+00 : f32
    %261 = vector.broadcast %cst_68 : f32 to vector<2x32xf32>
    %262 = arith.addf %261, %260 : vector<2x32xf32>
    %263 = arith.divf %261, %262 : vector<2x32xf32>
    %264 = vector.extract_strided_slice %251 {offsets = [0, 64], sizes = [2, 32], strides = [1, 1]} : vector<2x128xf32> to vector<2x32xf32>
    %265 = math.tanh %264 : vector<2x32xf32>
    %266 = vector.extract_strided_slice %251 {offsets = [0, 96], sizes = [2, 32], strides = [1, 1]} : vector<2x128xf32> to vector<2x32xf32>
    %267 = arith.negf %266 : vector<2x32xf32>
    %268 = math.exp %267 : vector<2x32xf32>
    %cst_69 = arith.constant 1.000000e+00 : f32
    %269 = vector.broadcast %cst_69 : f32 to vector<2x32xf32>
    %270 = arith.addf %269, %268 : vector<2x32xf32>
    %271 = arith.divf %269, %270 : vector<2x32xf32>
    %272 = arith.mulf %263, %199 : vector<2x32xf32>
    %273 = arith.mulf %257, %265 : vector<2x32xf32>
    %274 = arith.addf %272, %273 : vector<2x32xf32>
    %275 = math.tanh %274 : vector<2x32xf32>
    %276 = arith.mulf %271, %275 : vector<2x32xf32>
    %277 = vector.broadcast %245 : i32 to vector<2x1xi32>
    %278 = arith.cmpi slt, %277, %0 : vector<2x1xi32>
    %cst_70 = arith.constant 0.000000e+00 : f32
    %279 = vector.shape_cast %278 : vector<2x1xi1> to vector<2x1xi1>
    %280 = vector.broadcast %279 : vector<2x1xi1> to vector<2x32xi1>
    %281 = vector.broadcast %cst_70 : f32 to vector<2x32xf32>
    %282 = arith.select %280, %276, %281 : vector<2x32xi1>, vector<2x32xf32>
    %283 = arith.index_cast %247 : i32 to index
    %c0_71 = arith.constant 0 : index
    %284 = vector.load %arg19[%283, %c0_71] : memref<16x32xf32, #tpu.memory_space<vmem>>, vector<2x32xf32>
    tpu.vector_store %arg19[%283, %c0_71], %282 {strides = array<i32>} : memref<16x32xf32, #tpu.memory_space<vmem>>, vector<2x32xf32>,
    %285 = vector.shape_cast %278 : vector<2x1xi1> to vector<2x1xi1>
    %286 = vector.broadcast %285 : vector<2x1xi1> to vector<2x32xi1>
    %287 = arith.select %286, %276, %196 : vector<2x32xi1>, vector<2x32xf32>
    %288 = vector.shape_cast %278 : vector<2x1xi1> to vector<2x1xi1>
    %289 = vector.broadcast %288 : vector<2x1xi1> to vector<2x32xi1>
    %290 = arith.select %289, %274, %199 : vector<2x32xi1>, vector<2x32xf32>
    %c3_i32 = arith.constant 3 : i32
    %c2_i32_72 = arith.constant 2 : i32
    %291 = arith.muli %c3_i32, %c2_i32_72 : i32
    %292 = tpu.assume_multiple %291, 2 : i32
    %293 = arith.index_cast %292 : i32 to index
    %c0_73 = arith.constant 0 : index
    %294 = vector.load %arg16[%293, %c0_73] : memref<16x128xf32, #tpu.memory_space<vmem>>, vector<2x128xf32>
    %cst_74 = arith.constant dense<0.000000e+00> : vector<2x128xf32>
    %295 = tpu.matmul %241, %14, %cst_74 {dimension_numbers = #tpu.dot_dimension_numbers<[1], [0], [0], [1], [0, 0, 1, 1], [], []>} : vector<2x32xf32>, vector<32x128xf32>, vector<2x128xf32> -> vector<2x128xf32>
    %296 = arith.addf %294, %295 : vector<2x128xf32>
    %297 = vector.extract_strided_slice %296 {offsets = [0, 0], sizes = [2, 32], strides = [1, 1]} : vector<2x128xf32> to vector<2x32xf32>
    %298 = arith.negf %297 : vector<2x32xf32>
    %299 = math.exp %298 : vector<2x32xf32>
    %cst_75 = arith.constant 1.000000e+00 : f32
    %300 = vector.broadcast %cst_75 : f32 to vector<2x32xf32>
    %301 = arith.addf %300, %299 : vector<2x32xf32>
    %302 = arith.divf %300, %301 : vector<2x32xf32>
    %303 = vector.extract_strided_slice %296 {offsets = [0, 32], sizes = [2, 32], strides = [1, 1]} : vector<2x128xf32> to vector<2x32xf32>
    %304 = arith.negf %303 : vector<2x32xf32>
    %305 = math.exp %304 : vector<2x32xf32>
    %cst_76 = arith.constant 1.000000e+00 : f32
    %306 = vector.broadcast %cst_76 : f32 to vector<2x32xf32>
    %307 = arith.addf %306, %305 : vector<2x32xf32>
    %308 = arith.divf %306, %307 : vector<2x32xf32>
    %309 = vector.extract_strided_slice %296 {offsets = [0, 64], sizes = [2, 32], strides = [1, 1]} : vector<2x128xf32> to vector<2x32xf32>
    %310 = math.tanh %309 : vector<2x32xf32>
    %311 = vector.extract_strided_slice %296 {offsets = [0, 96], sizes = [2, 32], strides = [1, 1]} : vector<2x128xf32> to vector<2x32xf32>
    %312 = arith.negf %311 : vector<2x32xf32>
    %313 = math.exp %312 : vector<2x32xf32>
    %cst_77 = arith.constant 1.000000e+00 : f32
    %314 = vector.broadcast %cst_77 : f32 to vector<2x32xf32>
    %315 = arith.addf %314, %313 : vector<2x32xf32>
    %316 = arith.divf %314, %315 : vector<2x32xf32>
    %317 = arith.mulf %308, %244 : vector<2x32xf32>
    %318 = arith.mulf %302, %310 : vector<2x32xf32>
    %319 = arith.addf %317, %318 : vector<2x32xf32>
    %320 = math.tanh %319 : vector<2x32xf32>
    %321 = arith.mulf %316, %320 : vector<2x32xf32>
    %322 = vector.broadcast %c3_i32 : i32 to vector<2x1xi32>
    %323 = arith.cmpi slt, %322, %0 : vector<2x1xi32>
    %cst_78 = arith.constant 0.000000e+00 : f32
    %324 = vector.shape_cast %323 : vector<2x1xi1> to vector<2x1xi1>
    %325 = vector.broadcast %324 : vector<2x1xi1> to vector<2x32xi1>
    %326 = vector.broadcast %cst_78 : f32 to vector<2x32xf32>
    %327 = arith.select %325, %321, %326 : vector<2x32xi1>, vector<2x32xf32>
    %328 = arith.index_cast %292 : i32 to index
    %c0_79 = arith.constant 0 : index
    %329 = vector.load %arg18[%328, %c0_79] : memref<16x32xf32, #tpu.memory_space<vmem>>, vector<2x32xf32>
    tpu.vector_store %arg18[%328, %c0_79], %327 {strides = array<i32>} : memref<16x32xf32, #tpu.memory_space<vmem>>, vector<2x32xf32>,
    %330 = vector.shape_cast %323 : vector<2x1xi1> to vector<2x1xi1>
    %331 = vector.broadcast %330 : vector<2x1xi1> to vector<2x32xi1>
    %332 = arith.select %331, %321, %241 : vector<2x32xi1>, vector<2x32xf32>
    %333 = vector.shape_cast %323 : vector<2x1xi1> to vector<2x1xi1>
    %334 = vector.broadcast %333 : vector<2x1xi1> to vector<2x32xi1>
    %335 = arith.select %334, %319, %244 : vector<2x32xi1>, vector<2x32xf32>
    %c7_i32_80 = arith.constant 7 : i32
    %336 = arith.subi %c7_i32_80, %c3_i32 : i32
    %c2_i32_81 = arith.constant 2 : i32
    %337 = arith.muli %336, %c2_i32_81 : i32
    %338 = tpu.assume_multiple %337, 2 : i32
    %339 = arith.index_cast %338 : i32 to index
    %c0_82 = arith.constant 0 : index
    %340 = vector.load %arg17[%339, %c0_82] : memref<16x128xf32, #tpu.memory_space<vmem>>, vector<2x128xf32>
    %cst_83 = arith.constant dense<0.000000e+00> : vector<2x128xf32>
    %341 = tpu.matmul %287, %15, %cst_83 {dimension_numbers = #tpu.dot_dimension_numbers<[1], [0], [0], [1], [0, 0, 1, 1], [], []>} : vector<2x32xf32>, vector<32x128xf32>, vector<2x128xf32> -> vector<2x128xf32>
    %342 = arith.addf %340, %341 : vector<2x128xf32>
    %343 = vector.extract_strided_slice %342 {offsets = [0, 0], sizes = [2, 32], strides = [1, 1]} : vector<2x128xf32> to vector<2x32xf32>
    %344 = arith.negf %343 : vector<2x32xf32>
    %345 = math.exp %344 : vector<2x32xf32>
    %cst_84 = arith.constant 1.000000e+00 : f32
    %346 = vector.broadcast %cst_84 : f32 to vector<2x32xf32>
    %347 = arith.addf %346, %345 : vector<2x32xf32>
    %348 = arith.divf %346, %347 : vector<2x32xf32>
    %349 = vector.extract_strided_slice %342 {offsets = [0, 32], sizes = [2, 32], strides = [1, 1]} : vector<2x128xf32> to vector<2x32xf32>
    %350 = arith.negf %349 : vector<2x32xf32>
    %351 = math.exp %350 : vector<2x32xf32>
    %cst_85 = arith.constant 1.000000e+00 : f32
    %352 = vector.broadcast %cst_85 : f32 to vector<2x32xf32>
    %353 = arith.addf %352, %351 : vector<2x32xf32>
    %354 = arith.divf %352, %353 : vector<2x32xf32>
    %355 = vector.extract_strided_slice %342 {offsets = [0, 64], sizes = [2, 32], strides = [1, 1]} : vector<2x128xf32> to vector<2x32xf32>
    %356 = math.tanh %355 : vector<2x32xf32>
    %357 = vector.extract_strided_slice %342 {offsets = [0, 96], sizes = [2, 32], strides = [1, 1]} : vector<2x128xf32> to vector<2x32xf32>
    %358 = arith.negf %357 : vector<2x32xf32>
    %359 = math.exp %358 : vector<2x32xf32>
    %cst_86 = arith.constant 1.000000e+00 : f32
    %360 = vector.broadcast %cst_86 : f32 to vector<2x32xf32>
    %361 = arith.addf %360, %359 : vector<2x32xf32>
    %362 = arith.divf %360, %361 : vector<2x32xf32>
    %363 = arith.mulf %354, %290 : vector<2x32xf32>
    %364 = arith.mulf %348, %356 : vector<2x32xf32>
    %365 = arith.addf %363, %364 : vector<2x32xf32>
    %366 = math.tanh %365 : vector<2x32xf32>
    %367 = arith.mulf %362, %366 : vector<2x32xf32>
    %368 = vector.broadcast %336 : i32 to vector<2x1xi32>
    %369 = arith.cmpi slt, %368, %0 : vector<2x1xi32>
    %cst_87 = arith.constant 0.000000e+00 : f32
    %370 = vector.shape_cast %369 : vector<2x1xi1> to vector<2x1xi1>
    %371 = vector.broadcast %370 : vector<2x1xi1> to vector<2x32xi1>
    %372 = vector.broadcast %cst_87 : f32 to vector<2x32xf32>
    %373 = arith.select %371, %367, %372 : vector<2x32xi1>, vector<2x32xf32>
    %374 = arith.index_cast %338 : i32 to index
    %c0_88 = arith.constant 0 : index
    %375 = vector.load %arg19[%374, %c0_88] : memref<16x32xf32, #tpu.memory_space<vmem>>, vector<2x32xf32>
    tpu.vector_store %arg19[%374, %c0_88], %373 {strides = array<i32>} : memref<16x32xf32, #tpu.memory_space<vmem>>, vector<2x32xf32>,
    %376 = vector.shape_cast %369 : vector<2x1xi1> to vector<2x1xi1>
    %377 = vector.broadcast %376 : vector<2x1xi1> to vector<2x32xi1>
    %378 = arith.select %377, %367, %287 : vector<2x32xi1>, vector<2x32xf32>
    %379 = vector.shape_cast %369 : vector<2x1xi1> to vector<2x1xi1>
    %380 = vector.broadcast %379 : vector<2x1xi1> to vector<2x32xi1>
    %381 = arith.select %380, %365, %290 : vector<2x32xi1>, vector<2x32xf32>
    %c4_i32 = arith.constant 4 : i32
    %c2_i32_89 = arith.constant 2 : i32
    %382 = arith.muli %c4_i32, %c2_i32_89 : i32
    %383 = tpu.assume_multiple %382, 2 : i32
    %384 = arith.index_cast %383 : i32 to index
    %c0_90 = arith.constant 0 : index
    %385 = vector.load %arg16[%384, %c0_90] : memref<16x128xf32, #tpu.memory_space<vmem>>, vector<2x128xf32>
    %cst_91 = arith.constant dense<0.000000e+00> : vector<2x128xf32>
    %386 = tpu.matmul %332, %14, %cst_91 {dimension_numbers = #tpu.dot_dimension_numbers<[1], [0], [0], [1], [0, 0, 1, 1], [], []>} : vector<2x32xf32>, vector<32x128xf32>, vector<2x128xf32> -> vector<2x128xf32>
    %387 = arith.addf %385, %386 : vector<2x128xf32>
    %388 = vector.extract_strided_slice %387 {offsets = [0, 0], sizes = [2, 32], strides = [1, 1]} : vector<2x128xf32> to vector<2x32xf32>
    %389 = arith.negf %388 : vector<2x32xf32>
    %390 = math.exp %389 : vector<2x32xf32>
    %cst_92 = arith.constant 1.000000e+00 : f32
    %391 = vector.broadcast %cst_92 : f32 to vector<2x32xf32>
    %392 = arith.addf %391, %390 : vector<2x32xf32>
    %393 = arith.divf %391, %392 : vector<2x32xf32>
    %394 = vector.extract_strided_slice %387 {offsets = [0, 32], sizes = [2, 32], strides = [1, 1]} : vector<2x128xf32> to vector<2x32xf32>
    %395 = arith.negf %394 : vector<2x32xf32>
    %396 = math.exp %395 : vector<2x32xf32>
    %cst_93 = arith.constant 1.000000e+00 : f32
    %397 = vector.broadcast %cst_93 : f32 to vector<2x32xf32>
    %398 = arith.addf %397, %396 : vector<2x32xf32>
    %399 = arith.divf %397, %398 : vector<2x32xf32>
    %400 = vector.extract_strided_slice %387 {offsets = [0, 64], sizes = [2, 32], strides = [1, 1]} : vector<2x128xf32> to vector<2x32xf32>
    %401 = math.tanh %400 : vector<2x32xf32>
    %402 = vector.extract_strided_slice %387 {offsets = [0, 96], sizes = [2, 32], strides = [1, 1]} : vector<2x128xf32> to vector<2x32xf32>
    %403 = arith.negf %402 : vector<2x32xf32>
    %404 = math.exp %403 : vector<2x32xf32>
    %cst_94 = arith.constant 1.000000e+00 : f32
    %405 = vector.broadcast %cst_94 : f32 to vector<2x32xf32>
    %406 = arith.addf %405, %404 : vector<2x32xf32>
    %407 = arith.divf %405, %406 : vector<2x32xf32>
    %408 = arith.mulf %399, %335 : vector<2x32xf32>
    %409 = arith.mulf %393, %401 : vector<2x32xf32>
    %410 = arith.addf %408, %409 : vector<2x32xf32>
    %411 = math.tanh %410 : vector<2x32xf32>
    %412 = arith.mulf %407, %411 : vector<2x32xf32>
    %413 = vector.broadcast %c4_i32 : i32 to vector<2x1xi32>
    %414 = arith.cmpi slt, %413, %0 : vector<2x1xi32>
    %cst_95 = arith.constant 0.000000e+00 : f32
    %415 = vector.shape_cast %414 : vector<2x1xi1> to vector<2x1xi1>
    %416 = vector.broadcast %415 : vector<2x1xi1> to vector<2x32xi1>
    %417 = vector.broadcast %cst_95 : f32 to vector<2x32xf32>
    %418 = arith.select %416, %412, %417 : vector<2x32xi1>, vector<2x32xf32>
    %419 = arith.index_cast %383 : i32 to index
    %c0_96 = arith.constant 0 : index
    %420 = vector.load %arg18[%419, %c0_96] : memref<16x32xf32, #tpu.memory_space<vmem>>, vector<2x32xf32>
    tpu.vector_store %arg18[%419, %c0_96], %418 {strides = array<i32>} : memref<16x32xf32, #tpu.memory_space<vmem>>, vector<2x32xf32>,
    %421 = vector.shape_cast %414 : vector<2x1xi1> to vector<2x1xi1>
    %422 = vector.broadcast %421 : vector<2x1xi1> to vector<2x32xi1>
    %423 = arith.select %422, %412, %332 : vector<2x32xi1>, vector<2x32xf32>
    %424 = vector.shape_cast %414 : vector<2x1xi1> to vector<2x1xi1>
    %425 = vector.broadcast %424 : vector<2x1xi1> to vector<2x32xi1>
    %426 = arith.select %425, %410, %335 : vector<2x32xi1>, vector<2x32xf32>
    %c7_i32_97 = arith.constant 7 : i32
    %427 = arith.subi %c7_i32_97, %c4_i32 : i32
    %c2_i32_98 = arith.constant 2 : i32
    %428 = arith.muli %427, %c2_i32_98 : i32
    %429 = tpu.assume_multiple %428, 2 : i32
    %430 = arith.index_cast %429 : i32 to index
    %c0_99 = arith.constant 0 : index
    %431 = vector.load %arg17[%430, %c0_99] : memref<16x128xf32, #tpu.memory_space<vmem>>, vector<2x128xf32>
    %cst_100 = arith.constant dense<0.000000e+00> : vector<2x128xf32>
    %432 = tpu.matmul %378, %15, %cst_100 {dimension_numbers = #tpu.dot_dimension_numbers<[1], [0], [0], [1], [0, 0, 1, 1], [], []>} : vector<2x32xf32>, vector<32x128xf32>, vector<2x128xf32> -> vector<2x128xf32>
    %433 = arith.addf %431, %432 : vector<2x128xf32>
    %434 = vector.extract_strided_slice %433 {offsets = [0, 0], sizes = [2, 32], strides = [1, 1]} : vector<2x128xf32> to vector<2x32xf32>
    %435 = arith.negf %434 : vector<2x32xf32>
    %436 = math.exp %435 : vector<2x32xf32>
    %cst_101 = arith.constant 1.000000e+00 : f32
    %437 = vector.broadcast %cst_101 : f32 to vector<2x32xf32>
    %438 = arith.addf %437, %436 : vector<2x32xf32>
    %439 = arith.divf %437, %438 : vector<2x32xf32>
    %440 = vector.extract_strided_slice %433 {offsets = [0, 32], sizes = [2, 32], strides = [1, 1]} : vector<2x128xf32> to vector<2x32xf32>
    %441 = arith.negf %440 : vector<2x32xf32>
    %442 = math.exp %441 : vector<2x32xf32>
    %cst_102 = arith.constant 1.000000e+00 : f32
    %443 = vector.broadcast %cst_102 : f32 to vector<2x32xf32>
    %444 = arith.addf %443, %442 : vector<2x32xf32>
    %445 = arith.divf %443, %444 : vector<2x32xf32>
    %446 = vector.extract_strided_slice %433 {offsets = [0, 64], sizes = [2, 32], strides = [1, 1]} : vector<2x128xf32> to vector<2x32xf32>
    %447 = math.tanh %446 : vector<2x32xf32>
    %448 = vector.extract_strided_slice %433 {offsets = [0, 96], sizes = [2, 32], strides = [1, 1]} : vector<2x128xf32> to vector<2x32xf32>
    %449 = arith.negf %448 : vector<2x32xf32>
    %450 = math.exp %449 : vector<2x32xf32>
    %cst_103 = arith.constant 1.000000e+00 : f32
    %451 = vector.broadcast %cst_103 : f32 to vector<2x32xf32>
    %452 = arith.addf %451, %450 : vector<2x32xf32>
    %453 = arith.divf %451, %452 : vector<2x32xf32>
    %454 = arith.mulf %445, %381 : vector<2x32xf32>
    %455 = arith.mulf %439, %447 : vector<2x32xf32>
    %456 = arith.addf %454, %455 : vector<2x32xf32>
    %457 = math.tanh %456 : vector<2x32xf32>
    %458 = arith.mulf %453, %457 : vector<2x32xf32>
    %459 = vector.broadcast %427 : i32 to vector<2x1xi32>
    %460 = arith.cmpi slt, %459, %0 : vector<2x1xi32>
    %cst_104 = arith.constant 0.000000e+00 : f32
    %461 = vector.shape_cast %460 : vector<2x1xi1> to vector<2x1xi1>
    %462 = vector.broadcast %461 : vector<2x1xi1> to vector<2x32xi1>
    %463 = vector.broadcast %cst_104 : f32 to vector<2x32xf32>
    %464 = arith.select %462, %458, %463 : vector<2x32xi1>, vector<2x32xf32>
    %465 = arith.index_cast %429 : i32 to index
    %c0_105 = arith.constant 0 : index
    %466 = vector.load %arg19[%465, %c0_105] : memref<16x32xf32, #tpu.memory_space<vmem>>, vector<2x32xf32>
    tpu.vector_store %arg19[%465, %c0_105], %464 {strides = array<i32>} : memref<16x32xf32, #tpu.memory_space<vmem>>, vector<2x32xf32>,
    %467 = vector.shape_cast %460 : vector<2x1xi1> to vector<2x1xi1>
    %468 = vector.broadcast %467 : vector<2x1xi1> to vector<2x32xi1>
    %469 = arith.select %468, %458, %378 : vector<2x32xi1>, vector<2x32xf32>
    %470 = vector.shape_cast %460 : vector<2x1xi1> to vector<2x1xi1>
    %471 = vector.broadcast %470 : vector<2x1xi1> to vector<2x32xi1>
    %472 = arith.select %471, %456, %381 : vector<2x32xi1>, vector<2x32xf32>
    %c5_i32 = arith.constant 5 : i32
    %c2_i32_106 = arith.constant 2 : i32
    %473 = arith.muli %c5_i32, %c2_i32_106 : i32
    %474 = tpu.assume_multiple %473, 2 : i32
    %475 = arith.index_cast %474 : i32 to index
    %c0_107 = arith.constant 0 : index
    %476 = vector.load %arg16[%475, %c0_107] : memref<16x128xf32, #tpu.memory_space<vmem>>, vector<2x128xf32>
    %cst_108 = arith.constant dense<0.000000e+00> : vector<2x128xf32>
    %477 = tpu.matmul %423, %14, %cst_108 {dimension_numbers = #tpu.dot_dimension_numbers<[1], [0], [0], [1], [0, 0, 1, 1], [], []>} : vector<2x32xf32>, vector<32x128xf32>, vector<2x128xf32> -> vector<2x128xf32>
    %478 = arith.addf %476, %477 : vector<2x128xf32>
    %479 = vector.extract_strided_slice %478 {offsets = [0, 0], sizes = [2, 32], strides = [1, 1]} : vector<2x128xf32> to vector<2x32xf32>
    %480 = arith.negf %479 : vector<2x32xf32>
    %481 = math.exp %480 : vector<2x32xf32>
    %cst_109 = arith.constant 1.000000e+00 : f32
    %482 = vector.broadcast %cst_109 : f32 to vector<2x32xf32>
    %483 = arith.addf %482, %481 : vector<2x32xf32>
    %484 = arith.divf %482, %483 : vector<2x32xf32>
    %485 = vector.extract_strided_slice %478 {offsets = [0, 32], sizes = [2, 32], strides = [1, 1]} : vector<2x128xf32> to vector<2x32xf32>
    %486 = arith.negf %485 : vector<2x32xf32>
    %487 = math.exp %486 : vector<2x32xf32>
    %cst_110 = arith.constant 1.000000e+00 : f32
    %488 = vector.broadcast %cst_110 : f32 to vector<2x32xf32>
    %489 = arith.addf %488, %487 : vector<2x32xf32>
    %490 = arith.divf %488, %489 : vector<2x32xf32>
    %491 = vector.extract_strided_slice %478 {offsets = [0, 64], sizes = [2, 32], strides = [1, 1]} : vector<2x128xf32> to vector<2x32xf32>
    %492 = math.tanh %491 : vector<2x32xf32>
    %493 = vector.extract_strided_slice %478 {offsets = [0, 96], sizes = [2, 32], strides = [1, 1]} : vector<2x128xf32> to vector<2x32xf32>
    %494 = arith.negf %493 : vector<2x32xf32>
    %495 = math.exp %494 : vector<2x32xf32>
    %cst_111 = arith.constant 1.000000e+00 : f32
    %496 = vector.broadcast %cst_111 : f32 to vector<2x32xf32>
    %497 = arith.addf %496, %495 : vector<2x32xf32>
    %498 = arith.divf %496, %497 : vector<2x32xf32>
    %499 = arith.mulf %490, %426 : vector<2x32xf32>
    %500 = arith.mulf %484, %492 : vector<2x32xf32>
    %501 = arith.addf %499, %500 : vector<2x32xf32>
    %502 = math.tanh %501 : vector<2x32xf32>
    %503 = arith.mulf %498, %502 : vector<2x32xf32>
    %504 = vector.broadcast %c5_i32 : i32 to vector<2x1xi32>
    %505 = arith.cmpi slt, %504, %0 : vector<2x1xi32>
    %cst_112 = arith.constant 0.000000e+00 : f32
    %506 = vector.shape_cast %505 : vector<2x1xi1> to vector<2x1xi1>
    %507 = vector.broadcast %506 : vector<2x1xi1> to vector<2x32xi1>
    %508 = vector.broadcast %cst_112 : f32 to vector<2x32xf32>
    %509 = arith.select %507, %503, %508 : vector<2x32xi1>, vector<2x32xf32>
    %510 = arith.index_cast %474 : i32 to index
    %c0_113 = arith.constant 0 : index
    %511 = vector.load %arg18[%510, %c0_113] : memref<16x32xf32, #tpu.memory_space<vmem>>, vector<2x32xf32>
    tpu.vector_store %arg18[%510, %c0_113], %509 {strides = array<i32>} : memref<16x32xf32, #tpu.memory_space<vmem>>, vector<2x32xf32>,
    %512 = vector.shape_cast %505 : vector<2x1xi1> to vector<2x1xi1>
    %513 = vector.broadcast %512 : vector<2x1xi1> to vector<2x32xi1>
    %514 = arith.select %513, %503, %423 : vector<2x32xi1>, vector<2x32xf32>
    %515 = vector.shape_cast %505 : vector<2x1xi1> to vector<2x1xi1>
    %516 = vector.broadcast %515 : vector<2x1xi1> to vector<2x32xi1>
    %517 = arith.select %516, %501, %426 : vector<2x32xi1>, vector<2x32xf32>
    %c7_i32_114 = arith.constant 7 : i32
    %518 = arith.subi %c7_i32_114, %c5_i32 : i32
    %c2_i32_115 = arith.constant 2 : i32
    %519 = arith.muli %518, %c2_i32_115 : i32
    %520 = tpu.assume_multiple %519, 2 : i32
    %521 = arith.index_cast %520 : i32 to index
    %c0_116 = arith.constant 0 : index
    %522 = vector.load %arg17[%521, %c0_116] : memref<16x128xf32, #tpu.memory_space<vmem>>, vector<2x128xf32>
    %cst_117 = arith.constant dense<0.000000e+00> : vector<2x128xf32>
    %523 = tpu.matmul %469, %15, %cst_117 {dimension_numbers = #tpu.dot_dimension_numbers<[1], [0], [0], [1], [0, 0, 1, 1], [], []>} : vector<2x32xf32>, vector<32x128xf32>, vector<2x128xf32> -> vector<2x128xf32>
    %524 = arith.addf %522, %523 : vector<2x128xf32>
    %525 = vector.extract_strided_slice %524 {offsets = [0, 0], sizes = [2, 32], strides = [1, 1]} : vector<2x128xf32> to vector<2x32xf32>
    %526 = arith.negf %525 : vector<2x32xf32>
    %527 = math.exp %526 : vector<2x32xf32>
    %cst_118 = arith.constant 1.000000e+00 : f32
    %528 = vector.broadcast %cst_118 : f32 to vector<2x32xf32>
    %529 = arith.addf %528, %527 : vector<2x32xf32>
    %530 = arith.divf %528, %529 : vector<2x32xf32>
    %531 = vector.extract_strided_slice %524 {offsets = [0, 32], sizes = [2, 32], strides = [1, 1]} : vector<2x128xf32> to vector<2x32xf32>
    %532 = arith.negf %531 : vector<2x32xf32>
    %533 = math.exp %532 : vector<2x32xf32>
    %cst_119 = arith.constant 1.000000e+00 : f32
    %534 = vector.broadcast %cst_119 : f32 to vector<2x32xf32>
    %535 = arith.addf %534, %533 : vector<2x32xf32>
    %536 = arith.divf %534, %535 : vector<2x32xf32>
    %537 = vector.extract_strided_slice %524 {offsets = [0, 64], sizes = [2, 32], strides = [1, 1]} : vector<2x128xf32> to vector<2x32xf32>
    %538 = math.tanh %537 : vector<2x32xf32>
    %539 = vector.extract_strided_slice %524 {offsets = [0, 96], sizes = [2, 32], strides = [1, 1]} : vector<2x128xf32> to vector<2x32xf32>
    %540 = arith.negf %539 : vector<2x32xf32>
    %541 = math.exp %540 : vector<2x32xf32>
    %cst_120 = arith.constant 1.000000e+00 : f32
    %542 = vector.broadcast %cst_120 : f32 to vector<2x32xf32>
    %543 = arith.addf %542, %541 : vector<2x32xf32>
    %544 = arith.divf %542, %543 : vector<2x32xf32>
    %545 = arith.mulf %536, %472 : vector<2x32xf32>
    %546 = arith.mulf %530, %538 : vector<2x32xf32>
    %547 = arith.addf %545, %546 : vector<2x32xf32>
    %548 = math.tanh %547 : vector<2x32xf32>
    %549 = arith.mulf %544, %548 : vector<2x32xf32>
    %550 = vector.broadcast %518 : i32 to vector<2x1xi32>
    %551 = arith.cmpi slt, %550, %0 : vector<2x1xi32>
    %cst_121 = arith.constant 0.000000e+00 : f32
    %552 = vector.shape_cast %551 : vector<2x1xi1> to vector<2x1xi1>
    %553 = vector.broadcast %552 : vector<2x1xi1> to vector<2x32xi1>
    %554 = vector.broadcast %cst_121 : f32 to vector<2x32xf32>
    %555 = arith.select %553, %549, %554 : vector<2x32xi1>, vector<2x32xf32>
    %556 = arith.index_cast %520 : i32 to index
    %c0_122 = arith.constant 0 : index
    %557 = vector.load %arg19[%556, %c0_122] : memref<16x32xf32, #tpu.memory_space<vmem>>, vector<2x32xf32>
    tpu.vector_store %arg19[%556, %c0_122], %555 {strides = array<i32>} : memref<16x32xf32, #tpu.memory_space<vmem>>, vector<2x32xf32>,
    %558 = vector.shape_cast %551 : vector<2x1xi1> to vector<2x1xi1>
    %559 = vector.broadcast %558 : vector<2x1xi1> to vector<2x32xi1>
    %560 = arith.select %559, %549, %469 : vector<2x32xi1>, vector<2x32xf32>
    %561 = vector.shape_cast %551 : vector<2x1xi1> to vector<2x1xi1>
    %562 = vector.broadcast %561 : vector<2x1xi1> to vector<2x32xi1>
    %563 = arith.select %562, %547, %472 : vector<2x32xi1>, vector<2x32xf32>
    %c6_i32 = arith.constant 6 : i32
    %c2_i32_123 = arith.constant 2 : i32
    %564 = arith.muli %c6_i32, %c2_i32_123 : i32
    %565 = tpu.assume_multiple %564, 2 : i32
    %566 = arith.index_cast %565 : i32 to index
    %c0_124 = arith.constant 0 : index
    %567 = vector.load %arg16[%566, %c0_124] : memref<16x128xf32, #tpu.memory_space<vmem>>, vector<2x128xf32>
    %cst_125 = arith.constant dense<0.000000e+00> : vector<2x128xf32>
    %568 = tpu.matmul %514, %14, %cst_125 {dimension_numbers = #tpu.dot_dimension_numbers<[1], [0], [0], [1], [0, 0, 1, 1], [], []>} : vector<2x32xf32>, vector<32x128xf32>, vector<2x128xf32> -> vector<2x128xf32>
    %569 = arith.addf %567, %568 : vector<2x128xf32>
    %570 = vector.extract_strided_slice %569 {offsets = [0, 0], sizes = [2, 32], strides = [1, 1]} : vector<2x128xf32> to vector<2x32xf32>
    %571 = arith.negf %570 : vector<2x32xf32>
    %572 = math.exp %571 : vector<2x32xf32>
    %cst_126 = arith.constant 1.000000e+00 : f32
    %573 = vector.broadcast %cst_126 : f32 to vector<2x32xf32>
    %574 = arith.addf %573, %572 : vector<2x32xf32>
    %575 = arith.divf %573, %574 : vector<2x32xf32>
    %576 = vector.extract_strided_slice %569 {offsets = [0, 32], sizes = [2, 32], strides = [1, 1]} : vector<2x128xf32> to vector<2x32xf32>
    %577 = arith.negf %576 : vector<2x32xf32>
    %578 = math.exp %577 : vector<2x32xf32>
    %cst_127 = arith.constant 1.000000e+00 : f32
    %579 = vector.broadcast %cst_127 : f32 to vector<2x32xf32>
    %580 = arith.addf %579, %578 : vector<2x32xf32>
    %581 = arith.divf %579, %580 : vector<2x32xf32>
    %582 = vector.extract_strided_slice %569 {offsets = [0, 64], sizes = [2, 32], strides = [1, 1]} : vector<2x128xf32> to vector<2x32xf32>
    %583 = math.tanh %582 : vector<2x32xf32>
    %584 = vector.extract_strided_slice %569 {offsets = [0, 96], sizes = [2, 32], strides = [1, 1]} : vector<2x128xf32> to vector<2x32xf32>
    %585 = arith.negf %584 : vector<2x32xf32>
    %586 = math.exp %585 : vector<2x32xf32>
    %cst_128 = arith.constant 1.000000e+00 : f32
    %587 = vector.broadcast %cst_128 : f32 to vector<2x32xf32>
    %588 = arith.addf %587, %586 : vector<2x32xf32>
    %589 = arith.divf %587, %588 : vector<2x32xf32>
    %590 = arith.mulf %581, %517 : vector<2x32xf32>
    %591 = arith.mulf %575, %583 : vector<2x32xf32>
    %592 = arith.addf %590, %591 : vector<2x32xf32>
    %593 = math.tanh %592 : vector<2x32xf32>
    %594 = arith.mulf %589, %593 : vector<2x32xf32>
    %595 = vector.broadcast %c6_i32 : i32 to vector<2x1xi32>
    %596 = arith.cmpi slt, %595, %0 : vector<2x1xi32>
    %cst_129 = arith.constant 0.000000e+00 : f32
    %597 = vector.shape_cast %596 : vector<2x1xi1> to vector<2x1xi1>
    %598 = vector.broadcast %597 : vector<2x1xi1> to vector<2x32xi1>
    %599 = vector.broadcast %cst_129 : f32 to vector<2x32xf32>
    %600 = arith.select %598, %594, %599 : vector<2x32xi1>, vector<2x32xf32>
    %601 = arith.index_cast %565 : i32 to index
    %c0_130 = arith.constant 0 : index
    %602 = vector.load %arg18[%601, %c0_130] : memref<16x32xf32, #tpu.memory_space<vmem>>, vector<2x32xf32>
    tpu.vector_store %arg18[%601, %c0_130], %600 {strides = array<i32>} : memref<16x32xf32, #tpu.memory_space<vmem>>, vector<2x32xf32>,
    %603 = vector.shape_cast %596 : vector<2x1xi1> to vector<2x1xi1>
    %604 = vector.broadcast %603 : vector<2x1xi1> to vector<2x32xi1>
    %605 = arith.select %604, %594, %514 : vector<2x32xi1>, vector<2x32xf32>
    %606 = vector.shape_cast %596 : vector<2x1xi1> to vector<2x1xi1>
    %607 = vector.broadcast %606 : vector<2x1xi1> to vector<2x32xi1>
    %608 = arith.select %607, %592, %517 : vector<2x32xi1>, vector<2x32xf32>
    %c7_i32_131 = arith.constant 7 : i32
    %609 = arith.subi %c7_i32_131, %c6_i32 : i32
    %c2_i32_132 = arith.constant 2 : i32
    %610 = arith.muli %609, %c2_i32_132 : i32
    %611 = tpu.assume_multiple %610, 2 : i32
    %612 = arith.index_cast %611 : i32 to index
    %c0_133 = arith.constant 0 : index
    %613 = vector.load %arg17[%612, %c0_133] : memref<16x128xf32, #tpu.memory_space<vmem>>, vector<2x128xf32>
    %cst_134 = arith.constant dense<0.000000e+00> : vector<2x128xf32>
    %614 = tpu.matmul %560, %15, %cst_134 {dimension_numbers = #tpu.dot_dimension_numbers<[1], [0], [0], [1], [0, 0, 1, 1], [], []>} : vector<2x32xf32>, vector<32x128xf32>, vector<2x128xf32> -> vector<2x128xf32>
    %615 = arith.addf %613, %614 : vector<2x128xf32>
    %616 = vector.extract_strided_slice %615 {offsets = [0, 0], sizes = [2, 32], strides = [1, 1]} : vector<2x128xf32> to vector<2x32xf32>
    %617 = arith.negf %616 : vector<2x32xf32>
    %618 = math.exp %617 : vector<2x32xf32>
    %cst_135 = arith.constant 1.000000e+00 : f32
    %619 = vector.broadcast %cst_135 : f32 to vector<2x32xf32>
    %620 = arith.addf %619, %618 : vector<2x32xf32>
    %621 = arith.divf %619, %620 : vector<2x32xf32>
    %622 = vector.extract_strided_slice %615 {offsets = [0, 32], sizes = [2, 32], strides = [1, 1]} : vector<2x128xf32> to vector<2x32xf32>
    %623 = arith.negf %622 : vector<2x32xf32>
    %624 = math.exp %623 : vector<2x32xf32>
    %cst_136 = arith.constant 1.000000e+00 : f32
    %625 = vector.broadcast %cst_136 : f32 to vector<2x32xf32>
    %626 = arith.addf %625, %624 : vector<2x32xf32>
    %627 = arith.divf %625, %626 : vector<2x32xf32>
    %628 = vector.extract_strided_slice %615 {offsets = [0, 64], sizes = [2, 32], strides = [1, 1]} : vector<2x128xf32> to vector<2x32xf32>
    %629 = math.tanh %628 : vector<2x32xf32>
    %630 = vector.extract_strided_slice %615 {offsets = [0, 96], sizes = [2, 32], strides = [1, 1]} : vector<2x128xf32> to vector<2x32xf32>
    %631 = arith.negf %630 : vector<2x32xf32>
    %632 = math.exp %631 : vector<2x32xf32>
    %cst_137 = arith.constant 1.000000e+00 : f32
    %633 = vector.broadcast %cst_137 : f32 to vector<2x32xf32>
    %634 = arith.addf %633, %632 : vector<2x32xf32>
    %635 = arith.divf %633, %634 : vector<2x32xf32>
    %636 = arith.mulf %627, %563 : vector<2x32xf32>
    %637 = arith.mulf %621, %629 : vector<2x32xf32>
    %638 = arith.addf %636, %637 : vector<2x32xf32>
    %639 = math.tanh %638 : vector<2x32xf32>
    %640 = arith.mulf %635, %639 : vector<2x32xf32>
    %641 = vector.broadcast %609 : i32 to vector<2x1xi32>
    %642 = arith.cmpi slt, %641, %0 : vector<2x1xi32>
    %cst_138 = arith.constant 0.000000e+00 : f32
    %643 = vector.shape_cast %642 : vector<2x1xi1> to vector<2x1xi1>
    %644 = vector.broadcast %643 : vector<2x1xi1> to vector<2x32xi1>
    %645 = vector.broadcast %cst_138 : f32 to vector<2x32xf32>
    %646 = arith.select %644, %640, %645 : vector<2x32xi1>, vector<2x32xf32>
    %647 = arith.index_cast %611 : i32 to index
    %c0_139 = arith.constant 0 : index
    %648 = vector.load %arg19[%647, %c0_139] : memref<16x32xf32, #tpu.memory_space<vmem>>, vector<2x32xf32>
    tpu.vector_store %arg19[%647, %c0_139], %646 {strides = array<i32>} : memref<16x32xf32, #tpu.memory_space<vmem>>, vector<2x32xf32>,
    %649 = vector.shape_cast %642 : vector<2x1xi1> to vector<2x1xi1>
    %650 = vector.broadcast %649 : vector<2x1xi1> to vector<2x32xi1>
    %651 = arith.select %650, %640, %560 : vector<2x32xi1>, vector<2x32xf32>
    %652 = vector.shape_cast %642 : vector<2x1xi1> to vector<2x1xi1>
    %653 = vector.broadcast %652 : vector<2x1xi1> to vector<2x32xi1>
    %654 = arith.select %653, %638, %563 : vector<2x32xi1>, vector<2x32xf32>
    %c7_i32_140 = arith.constant 7 : i32
    %c2_i32_141 = arith.constant 2 : i32
    %655 = arith.muli %c7_i32_140, %c2_i32_141 : i32
    %656 = tpu.assume_multiple %655, 2 : i32
    %657 = arith.index_cast %656 : i32 to index
    %c0_142 = arith.constant 0 : index
    %658 = vector.load %arg16[%657, %c0_142] : memref<16x128xf32, #tpu.memory_space<vmem>>, vector<2x128xf32>
    %cst_143 = arith.constant dense<0.000000e+00> : vector<2x128xf32>
    %659 = tpu.matmul %605, %14, %cst_143 {dimension_numbers = #tpu.dot_dimension_numbers<[1], [0], [0], [1], [0, 0, 1, 1], [], []>} : vector<2x32xf32>, vector<32x128xf32>, vector<2x128xf32> -> vector<2x128xf32>
    %660 = arith.addf %658, %659 : vector<2x128xf32>
    %661 = vector.extract_strided_slice %660 {offsets = [0, 0], sizes = [2, 32], strides = [1, 1]} : vector<2x128xf32> to vector<2x32xf32>
    %662 = arith.negf %661 : vector<2x32xf32>
    %663 = math.exp %662 : vector<2x32xf32>
    %cst_144 = arith.constant 1.000000e+00 : f32
    %664 = vector.broadcast %cst_144 : f32 to vector<2x32xf32>
    %665 = arith.addf %664, %663 : vector<2x32xf32>
    %666 = arith.divf %664, %665 : vector<2x32xf32>
    %667 = vector.extract_strided_slice %660 {offsets = [0, 32], sizes = [2, 32], strides = [1, 1]} : vector<2x128xf32> to vector<2x32xf32>
    %668 = arith.negf %667 : vector<2x32xf32>
    %669 = math.exp %668 : vector<2x32xf32>
    %cst_145 = arith.constant 1.000000e+00 : f32
    %670 = vector.broadcast %cst_145 : f32 to vector<2x32xf32>
    %671 = arith.addf %670, %669 : vector<2x32xf32>
    %672 = arith.divf %670, %671 : vector<2x32xf32>
    %673 = vector.extract_strided_slice %660 {offsets = [0, 64], sizes = [2, 32], strides = [1, 1]} : vector<2x128xf32> to vector<2x32xf32>
    %674 = math.tanh %673 : vector<2x32xf32>
    %675 = vector.extract_strided_slice %660 {offsets = [0, 96], sizes = [2, 32], strides = [1, 1]} : vector<2x128xf32> to vector<2x32xf32>
    %676 = arith.negf %675 : vector<2x32xf32>
    %677 = math.exp %676 : vector<2x32xf32>
    %cst_146 = arith.constant 1.000000e+00 : f32
    %678 = vector.broadcast %cst_146 : f32 to vector<2x32xf32>
    %679 = arith.addf %678, %677 : vector<2x32xf32>
    %680 = arith.divf %678, %679 : vector<2x32xf32>
    %681 = arith.mulf %672, %608 : vector<2x32xf32>
    %682 = arith.mulf %666, %674 : vector<2x32xf32>
    %683 = arith.addf %681, %682 : vector<2x32xf32>
    %684 = math.tanh %683 : vector<2x32xf32>
    %685 = arith.mulf %680, %684 : vector<2x32xf32>
    %686 = vector.broadcast %c7_i32_140 : i32 to vector<2x1xi32>
    %687 = arith.cmpi slt, %686, %0 : vector<2x1xi32>
    %cst_147 = arith.constant 0.000000e+00 : f32
    %688 = vector.shape_cast %687 : vector<2x1xi1> to vector<2x1xi1>
    %689 = vector.broadcast %688 : vector<2x1xi1> to vector<2x32xi1>
    %690 = vector.broadcast %cst_147 : f32 to vector<2x32xf32>
    %691 = arith.select %689, %685, %690 : vector<2x32xi1>, vector<2x32xf32>
    %692 = arith.index_cast %656 : i32 to index
    %c0_148 = arith.constant 0 : index
    %693 = vector.load %arg18[%692, %c0_148] : memref<16x32xf32, #tpu.memory_space<vmem>>, vector<2x32xf32>
    tpu.vector_store %arg18[%692, %c0_148], %691 {strides = array<i32>} : memref<16x32xf32, #tpu.memory_space<vmem>>, vector<2x32xf32>,
    %694 = vector.shape_cast %687 : vector<2x1xi1> to vector<2x1xi1>
    %695 = vector.broadcast %694 : vector<2x1xi1> to vector<2x32xi1>
    %696 = arith.select %695, %685, %605 : vector<2x32xi1>, vector<2x32xf32>
    %697 = vector.shape_cast %687 : vector<2x1xi1> to vector<2x1xi1>
    %698 = vector.broadcast %697 : vector<2x1xi1> to vector<2x32xi1>
    %699 = arith.select %698, %683, %608 : vector<2x32xi1>, vector<2x32xf32>
    %c7_i32_149 = arith.constant 7 : i32
    %700 = arith.subi %c7_i32_149, %c7_i32_140 : i32
    %c2_i32_150 = arith.constant 2 : i32
    %701 = arith.muli %700, %c2_i32_150 : i32
    %702 = tpu.assume_multiple %701, 2 : i32
    %703 = arith.index_cast %702 : i32 to index
    %c0_151 = arith.constant 0 : index
    %704 = vector.load %arg17[%703, %c0_151] : memref<16x128xf32, #tpu.memory_space<vmem>>, vector<2x128xf32>
    %cst_152 = arith.constant dense<0.000000e+00> : vector<2x128xf32>
    %705 = tpu.matmul %651, %15, %cst_152 {dimension_numbers = #tpu.dot_dimension_numbers<[1], [0], [0], [1], [0, 0, 1, 1], [], []>} : vector<2x32xf32>, vector<32x128xf32>, vector<2x128xf32> -> vector<2x128xf32>
    %706 = arith.addf %704, %705 : vector<2x128xf32>
    %707 = vector.extract_strided_slice %706 {offsets = [0, 0], sizes = [2, 32], strides = [1, 1]} : vector<2x128xf32> to vector<2x32xf32>
    %708 = arith.negf %707 : vector<2x32xf32>
    %709 = math.exp %708 : vector<2x32xf32>
    %cst_153 = arith.constant 1.000000e+00 : f32
    %710 = vector.broadcast %cst_153 : f32 to vector<2x32xf32>
    %711 = arith.addf %710, %709 : vector<2x32xf32>
    %712 = arith.divf %710, %711 : vector<2x32xf32>
    %713 = vector.extract_strided_slice %706 {offsets = [0, 32], sizes = [2, 32], strides = [1, 1]} : vector<2x128xf32> to vector<2x32xf32>
    %714 = arith.negf %713 : vector<2x32xf32>
    %715 = math.exp %714 : vector<2x32xf32>
    %cst_154 = arith.constant 1.000000e+00 : f32
    %716 = vector.broadcast %cst_154 : f32 to vector<2x32xf32>
    %717 = arith.addf %716, %715 : vector<2x32xf32>
    %718 = arith.divf %716, %717 : vector<2x32xf32>
    %719 = vector.extract_strided_slice %706 {offsets = [0, 64], sizes = [2, 32], strides = [1, 1]} : vector<2x128xf32> to vector<2x32xf32>
    %720 = math.tanh %719 : vector<2x32xf32>
    %721 = vector.extract_strided_slice %706 {offsets = [0, 96], sizes = [2, 32], strides = [1, 1]} : vector<2x128xf32> to vector<2x32xf32>
    %722 = arith.negf %721 : vector<2x32xf32>
    %723 = math.exp %722 : vector<2x32xf32>
    %cst_155 = arith.constant 1.000000e+00 : f32
    %724 = vector.broadcast %cst_155 : f32 to vector<2x32xf32>
    %725 = arith.addf %724, %723 : vector<2x32xf32>
    %726 = arith.divf %724, %725 : vector<2x32xf32>
    %727 = arith.mulf %718, %654 : vector<2x32xf32>
    %728 = arith.mulf %712, %720 : vector<2x32xf32>
    %729 = arith.addf %727, %728 : vector<2x32xf32>
    %730 = math.tanh %729 : vector<2x32xf32>
    %731 = arith.mulf %726, %730 : vector<2x32xf32>
    %732 = vector.broadcast %700 : i32 to vector<2x1xi32>
    %733 = arith.cmpi slt, %732, %0 : vector<2x1xi32>
    %cst_156 = arith.constant 0.000000e+00 : f32
    %734 = vector.shape_cast %733 : vector<2x1xi1> to vector<2x1xi1>
    %735 = vector.broadcast %734 : vector<2x1xi1> to vector<2x32xi1>
    %736 = vector.broadcast %cst_156 : f32 to vector<2x32xf32>
    %737 = arith.select %735, %731, %736 : vector<2x32xi1>, vector<2x32xf32>
    %738 = arith.index_cast %702 : i32 to index
    %c0_157 = arith.constant 0 : index
    %739 = vector.load %arg19[%738, %c0_157] : memref<16x32xf32, #tpu.memory_space<vmem>>, vector<2x32xf32>
    tpu.vector_store %arg19[%738, %c0_157], %737 {strides = array<i32>} : memref<16x32xf32, #tpu.memory_space<vmem>>, vector<2x32xf32>,
    %740 = vector.shape_cast %733 : vector<2x1xi1> to vector<2x1xi1>
    %741 = vector.broadcast %740 : vector<2x1xi1> to vector<2x32xi1>
    %742 = arith.select %741, %731, %651 : vector<2x32xi1>, vector<2x32xf32>
    %743 = vector.shape_cast %733 : vector<2x1xi1> to vector<2x1xi1>
    %744 = vector.broadcast %743 : vector<2x1xi1> to vector<2x32xi1>
    %745 = arith.select %744, %729, %654 : vector<2x32xi1>, vector<2x32xf32>
    %c8_i32 = arith.constant 8 : i32
    %c0_158 = arith.constant 0 : index
    %c0_159 = arith.constant 0 : index
    %746 = vector.load %arg18[%c0_158, %c0_159] : memref<16x32xf32, #tpu.memory_space<vmem>>, vector<16x32xf32>
    %c0_160 = arith.constant 0 : index
    %c0_161 = arith.constant 0 : index
    %747 = vector.load %arg8[%c0_160, %c0_161] : memref<32x16xf32, #tpu.memory_space<vmem>>, vector<32x16xf32>
    %cst_162 = arith.constant dense<0.000000e+00> : vector<16x16xf32>
    %748 = tpu.matmul %746, %747, %cst_162 {dimension_numbers = #tpu.dot_dimension_numbers<[1], [0], [0], [1], [0, 0, 1, 1], [], []>} : vector<16x32xf32>, vector<32x16xf32>, vector<16x16xf32> -> vector<16x16xf32>
    %c0_163 = arith.constant 0 : index
    %c0_164 = arith.constant 0 : index
    %749 = vector.load %arg19[%c0_163, %c0_164] : memref<16x32xf32, #tpu.memory_space<vmem>>, vector<16x32xf32>
    %c0_165 = arith.constant 0 : index
    %c0_166 = arith.constant 0 : index
    %750 = vector.load %arg9[%c0_165, %c0_166] : memref<32x16xf32, #tpu.memory_space<vmem>>, vector<32x16xf32>
    %cst_167 = arith.constant dense<0.000000e+00> : vector<16x16xf32>
    %751 = tpu.matmul %749, %750, %cst_167 {dimension_numbers = #tpu.dot_dimension_numbers<[1], [0], [0], [1], [0, 0, 1, 1], [], []>} : vector<16x32xf32>, vector<32x16xf32>, vector<16x16xf32> -> vector<16x16xf32>
    %752 = arith.addf %748, %751 : vector<16x16xf32>
    %c0_168 = arith.constant 0 : index
    %c0_169 = arith.constant 0 : index
    %753 = vector.load %arg10[%c0_168, %c0_169] : memref<1x16xf32, #tpu.memory_space<vmem>>, vector<1x16xf32>
    %754 = vector.broadcast %753 : vector<1x16xf32> to vector<16x16xf32>
    %755 = arith.addf %752, %754 : vector<16x16xf32>
    %c0_170 = arith.constant 0 : index
    %c0_171 = arith.constant 0 : index
    %756 = vector.load %arg14[%c0_170, %c0_171] : memref<16x16xf32, #tpu.memory_space<vmem>>, vector<16x16xf32>
    tpu.vector_store %arg14[%c0_170, %c0_171], %755 {strides = array<i32>} : memref<16x16xf32, #tpu.memory_space<vmem>>, vector<16x16xf32>,
    %c0_172 = arith.constant 0 : index
    %c0_173 = arith.constant 0 : index
    %757 = vector.load %arg11[%c0_172, %c0_173] : memref<32x8xf32, #tpu.memory_space<vmem>>, vector<32x8xf32>
    %cst_174 = arith.constant dense<0.000000e+00> : vector<2x8xf32>
    %758 = tpu.matmul %696, %757, %cst_174 {dimension_numbers = #tpu.dot_dimension_numbers<[1], [0], [0], [1], [0, 0, 1, 1], [], []>} : vector<2x32xf32>, vector<32x8xf32>, vector<2x8xf32> -> vector<2x8xf32>
    %c0_175 = arith.constant 0 : index
    %c0_176 = arith.constant 0 : index
    %759 = vector.load %arg12[%c0_175, %c0_176] : memref<32x8xf32, #tpu.memory_space<vmem>>, vector<32x8xf32>
    %cst_177 = arith.constant dense<0.000000e+00> : vector<2x8xf32>
    %760 = tpu.matmul %742, %759, %cst_177 {dimension_numbers = #tpu.dot_dimension_numbers<[1], [0], [0], [1], [0, 0, 1, 1], [], []>} : vector<2x32xf32>, vector<32x8xf32>, vector<2x8xf32> -> vector<2x8xf32>
    %761 = arith.addf %758, %760 : vector<2x8xf32>
    %c0_178 = arith.constant 0 : index
    %c0_179 = arith.constant 0 : index
    %762 = vector.load %arg13[%c0_178, %c0_179] : memref<1x8xf32, #tpu.memory_space<vmem>>, vector<1x8xf32>
    %763 = vector.broadcast %762 : vector<1x8xf32> to vector<2x8xf32>
    %764 = arith.addf %761, %763 : vector<2x8xf32>
    %c0_180 = arith.constant 0 : index
    %c0_181 = arith.constant 0 : index
    %765 = vector.load %arg15[%c0_180, %c0_181] : memref<2x8xf32, #tpu.memory_space<vmem>>, vector<2x8xf32>
    tpu.vector_store %arg15[%c0_180, %c0_181], %764 {strides = array<i32>} : memref<2x8xf32, #tpu.memory_space<vmem>>, vector<2x8xf32>,
    return
  }
}

</mosaic_0001>

<llo_original>
// kernel: model_ias_forward.1
$region0: #{model_ias_forward.1}
  #allocation0 [shape = 'u32[]', space=smem, size = 0x4, offset = 0x4, fixed_abs, tag = 'smem constant byte address 0x4 - core index']
  #allocation1 [shape = 'u32[72,128]{1,0:T(1,128)}', space=vmem, size = 0x9000, scoped, tag = 'internal scratch']
  #allocation2 [shape = 'f32[16,128]{1,0:T(8,128)}', space=vmem, size = 0x2000, scoped, tag = 'scratch operand']
  #allocation3 [shape = 'f32[16,128]{1,0:T(8,128)}', space=vmem, size = 0x2000, scoped, tag = 'scratch operand']
  #allocation4 [shape = 'f32[16,32]{1,0:T(8,128)}', space=vmem, size = 0x2000, scoped, tag = 'scratch operand']
  #allocation5 [shape = 'f32[16,32]{1,0:T(8,128)}', space=vmem, size = 0x2000, scoped, tag = 'scratch operand']
  %s0 = inlined_call_operand.vmem [shape: f32[16,32], index: 0, kind: input, shape index: {}]
  %s1 = inlined_call_operand.vmem [shape: s32[2,1], index: 1, kind: input, shape index: {}]
  %s2 = inlined_call_operand.vmem [shape: f32[32,128], index: 2, kind: input, shape index: {}]
  %s3 = inlined_call_operand.vmem [shape: f32[32,128], index: 3, kind: input, shape index: {}]
  %s4 = inlined_call_operand.vmem [shape: f32[1,128], index: 4, kind: input, shape index: {}]
  %s5 = inlined_call_operand.vmem [shape: f32[32,128], index: 5, kind: input, shape index: {}]
  %s6 = inlined_call_operand.vmem [shape: f32[32,128], index: 6, kind: input, shape index: {}]
  %s7 = inlined_call_operand.vmem [shape: f32[1,128], index: 7, kind: input, shape index: {}]
  %s8 = inlined_call_operand.vmem [shape: f32[32,16], index: 8, kind: input, shape index: {}]
  %s9 = inlined_call_operand.vmem [shape: f32[32,16], index: 9, kind: input, shape index: {}]
  %s10 = inlined_call_operand.vmem [shape: f32[1,16], index: 10, kind: input, shape index: {}]
  %s11 = inlined_call_operand.vmem [shape: f32[32,8], index: 11, kind: input, shape index: {}]
  %s12 = inlined_call_operand.vmem [shape: f32[32,8], index: 12, kind: input, shape index: {}]
  %s13 = inlined_call_operand.vmem [shape: f32[1,8], index: 13, kind: input, shape index: {}]
  %s14 = inlined_call_operand.vmem [shape: f32[16,16], index: 14, kind: output, shape index: {0}]
  %s15 = inlined_call_operand.hbm [shape: f32[2,8], index: 15, kind: output, shape index: {1}]
  %16 = xla_tuple %s14, %s15
  %s17 = sld [smem:[#allocation0]]
  $region74: #{model_ias_forward.1} parent=0
    _
  %s19 = ssub.s32 1, %s17
  %s20 = scalar_select 0, %s19, %s17
  $region1: #{model_ias_forward.1} parent=0
    #allocation6 [shape = 'u8[1024]{0}', space=vmem, size = 0x400, scoped, tag = 'output window, operand 1, single buffered']
    #allocation7 [shape = 's32[1]{0}', space=sflag, size = 0x4, scoped, tag = 'scoped memory for model_ias_forward.1']
    %21 = vsyncpa [#allocation7], 0
    // Predicated region
    $region2: #{model_ias_forward.1} parent=1 // pred_check
      _
    $region3: #{model_ias_forward.1} parent=1 // pred_check_branch
      %23 = sbr.rel (0) target = $region5
    $region4: #{model_ias_forward.1} parent=1 // pred_region
      _
    $region5: #{model_ias_forward.1} parent=1 // pred_fallthru
      _
    // Predicated region
    $region6: #{model_ias_forward.1} parent=1 // pred_check
      _
    $region7: #{model_ias_forward.1} parent=1 // pred_check_branch
      %25 = sbr.rel (0) target = $region9
    $region8: #{model_ias_forward.1} parent=1 // pred_region
      _
    $region9: #{model_ias_forward.1} parent=1 // pred_fallthru
      _
    // Predicated region
    $region10: #{model_ias_forward.1} parent=1 // pred_check
      _
    $region11: #{model_ias_forward.1} parent=1 // pred_check_branch
      %27 = sbr.rel (0) target = $region13
    $region12: #{model_ias_forward.1} parent=1 // pred_region
      _
    $region13: #{model_ias_forward.1} parent=1 // pred_fallthru
      _
    // Predicated region
    $region14: #{model_ias_forward.1} parent=1 // pred_check
      _
    $region15: #{model_ias_forward.1} parent=1 // pred_check_branch
      %29 = sbr.rel (0) target = $region17
    $region16: #{model_ias_forward.1} parent=1 // pred_region
      _
    $region17: #{model_ias_forward.1} parent=1 // pred_fallthru
      _
    // Predicated region
    $region18: #{model_ias_forward.1} parent=1 // pred_check
      _
    $region19: #{model_ias_forward.1} parent=1 // pred_check_branch
      %31 = sbr.rel (0) target = $region21
    $region20: #{model_ias_forward.1} parent=1 // pred_region
      _
    $region21: #{model_ias_forward.1} parent=1 // pred_fallthru
      _
    // Predicated region
    $region22: #{model_ias_forward.1} parent=1 // pred_check
      _
    $region23: #{model_ias_forward.1} parent=1 // pred_check_branch
      %33 = sbr.rel (0) target = $region25
    $region24: #{model_ias_forward.1} parent=1 // pred_region
      _
    $region25: #{model_ias_forward.1} parent=1 // pred_fallthru
      _
    // Predicated region
    $region26: #{model_ias_forward.1} parent=1 // pred_check
      _
    $region27: #{model_ias_forward.1} parent=1 // pred_check_branch
      %35 = sbr.rel (0) target = $region29
    $region28: #{model_ias_forward.1} parent=1 // pred_region
      _
    $region29: #{model_ias_forward.1} parent=1 // pred_fallthru
      _
    // Predicated region
    $region30: #{model_ias_forward.1} parent=1 // pred_check
      _
    $region31: #{model_ias_forward.1} parent=1 // pred_check_branch
      %37 = sbr.rel (0) target = $region33
    $region32: #{model_ias_forward.1} parent=1 // pred_region
      _
    $region33: #{model_ias_forward.1} parent=1 // pred_fallthru
      _
    // Predicated region
    $region34: #{model_ias_forward.1} parent=1 // pred_check
      _
    $region35: #{model_ias_forward.1} parent=1 // pred_check_branch
      %39 = sbr.rel (0) target = $region37
    $region36: #{model_ias_forward.1} parent=1 // pred_region
      _
    $region37: #{model_ias_forward.1} parent=1 // pred_fallthru
      _
    // Predicated region
    $region38: #{model_ias_forward.1} parent=1 // pred_check
      _
    $region39: #{model_ias_forward.1} parent=1 // pred_check_branch
      %41 = sbr.rel (0) target = $region41
    $region40: #{model_ias_forward.1} parent=1 // pred_region
      _
    $region41: #{model_ias_forward.1} parent=1 // pred_fallthru
      _
    // Predicated region
    $region42: #{model_ias_forward.1} parent=1 // pred_check
      _
    $region43: #{model_ias_forward.1} parent=1 // pred_check_branch
      %43 = sbr.rel (0) target = $region45
    $region44: #{model_ias_forward.1} parent=1 // pred_region
      _
    $region45: #{model_ias_forward.1} parent=1 // pred_fallthru
      _
    // Predicated region
    $region46: #{model_ias_forward.1} parent=1 // pred_check
      _
    $region47: #{model_ias_forward.1} parent=1 // pred_check_branch
      %45 = sbr.rel (0) target = $region49
    $region48: #{model_ias_forward.1} parent=1 // pred_region
      _
    $region49: #{model_ias_forward.1} parent=1 // pred_fallthru
      _
    // Predicated region
    $region50: #{model_ias_forward.1} parent=1 // pred_check
      _
    $region51: #{model_ias_forward.1} parent=1 // pred_check_branch
      %47 = sbr.rel (0) target = $region53
    $region52: #{model_ias_forward.1} parent=1 // pred_region
      _
    $region53: #{model_ias_forward.1} parent=1 // pred_fallthru
      _
    // Predicated region
    $region54: #{model_ias_forward.1} parent=1 // pred_check
      _
    $region55: #{model_ias_forward.1} parent=1 // pred_check_branch
      %49 = sbr.rel (0) target = $region57
    $region56: #{model_ias_forward.1} parent=1 // pred_region
      _
    $region57: #{model_ias_forward.1} parent=1 // pred_fallthru
      _
    %v50 = vld [vmem:[%s1] sm:$0x3]
    %v51 = vld [vmem:[%s0] sm:$0xff]
    %v52 = vld [vmem:[%s0 + $0x8] sm:$0xff]
    %v53 = vld [vmem:[%s2] sm:$0xff]
    %v54 = vld [vmem:[%s2 + $0x8] sm:$0xff]
    %v55 = vld [vmem:[%s2 + $0x10] sm:$0xff]
    %v56 = vld [vmem:[%s2 + $0x18] sm:$0xff]
    %v57 = vld [vmem:[%s4] sm:$0x1]
    %v59 = vperm.slane %v57, 0
    %vm61 = vcmask 261120
    %v63 = vsel %vm61, %v51, 0
    %v66 = vsel %vm61, %v52, 0
    %68 = vmatpush.msra.mxu0 0.0
    %69 = vmatpush.msra.mxu0 0.0
    %70 = vmatpush.msra.mxu0 0.0
    %71 = vmatpush.msra.mxu0 0.0
    %72 = vmatpush.msra.mxu0 0.0
    %73 = vmatpush.msra.mxu0 0.0
    %74 = vmatpush.msra.mxu0 0.0
    %75 = vmatpush.msra.mxu0 0.0
    %76 = vmatpush.msra.mxu0 0.0
    %77 = vmatpush.msra.mxu0 0.0
    %78 = vmatpush.msra.mxu0 0.0
    %79 = vmatpush.msra.mxu0 0.0
    %80 = vmatpush.msra.mxu0 %v56
    %81 = vmatpush.msra.mxu0 %v55
    %82 = vmatpush.msra.mxu0 %v54
    %83 = vmatpush.msra.mxu0 %v53
    %84 = vmatmul.f32.gmra.mxu0 %v63
    %v85 = vpop.f32.mrf.mxu0
    %v86 = vadd.f32 %v59, %v85
    %87 = vmatmul.f32.gmra.mxu0 %v66
    %v88 = vpop.f32.mrf.mxu0
    %v89 = vadd.f32 %v59, %v88
    %90 = vdwg.mxu0
    %91 = vst [vmem:[#allocation2] sm:$0xff] %v86
    %92 = vst [vmem:[#allocation2 + $0x8] sm:$0xff] %v89
    %v93 = vld [vmem:[%s5] sm:$0xff]
    %v94 = vld [vmem:[%s5 + $0x8] sm:$0xff]
    %v95 = vld [vmem:[%s5 + $0x10] sm:$0xff]
    %v96 = vld [vmem:[%s5 + $0x18] sm:$0xff]
    %v97 = vld [vmem:[%s7] sm:$0x1]
    %v99 = vperm.slane %v97, 0
    %101 = vmatpush.msra.mxu0 0.0
    %102 = vmatpush.msra.mxu0 0.0
    %103 = vmatpush.msra.mxu0 0.0
    %104 = vmatpush.msra.mxu0 0.0
    %105 = vmatpush.msra.mxu0 0.0
    %106 = vmatpush.msra.mxu0 0.0
    %107 = vmatpush.msra.mxu0 0.0
    %108 = vmatpush.msra.mxu0 0.0
    %109 = vmatpush.msra.mxu0 0.0
    %110 = vmatpush.msra.mxu0 0.0
    %111 = vmatpush.msra.mxu0 0.0
    %112 = vmatpush.msra.mxu0 0.0
    %113 = vmatpush.msra.mxu0 %v96
    %114 = vmatpush.msra.mxu0 %v95
    %115 = vmatpush.msra.mxu0 %v94
    %116 = vmatpush.msra.mxu0 %v93
    %117 = vmatmul.f32.gmra.mxu0 %v63
    %v118 = vpop.f32.mrf.mxu0
    %v119 = vadd.f32 %v99, %v118
    %120 = vmatmul.f32.gmra.mxu0 %v66
    %v121 = vpop.f32.mrf.mxu0
    %v122 = vadd.f32 %v99, %v121
    %123 = vdwg.mxu0
    %124 = vst [vmem:[#allocation3] sm:$0xff] %v119
    %125 = vst [vmem:[#allocation3 + $0x8] sm:$0xff] %v122
    %v126 = vld [vmem:[%s3] sm:$0xff]
    %v127 = vld [vmem:[%s3 + $0x8] sm:$0xff]
    %v128 = vld [vmem:[%s3 + $0x10] sm:$0xff]
    %v129 = vld [vmem:[%s3 + $0x18] sm:$0xff]
    %v130 = vld [vmem:[%s6] sm:$0xff]
    %v131 = vld [vmem:[%s6 + $0x8] sm:$0xff]
    %v132 = vld [vmem:[%s6 + $0x10] sm:$0xff]
    %v133 = vld [vmem:[%s6 + $0x18] sm:$0xff]
    %v134 = vld [vmem:[#allocation2] sm:$0x3]
    %v136 = vsel %vm61, 0.0, 0
    %138 = vmatpush.msra.mxu0 0.0
    %139 = vmatpush.msra.mxu0 0.0
    %140 = vmatpush.msra.mxu0 0.0
    %141 = vmatpush.msra.mxu0 0.0
    %142 = vmatpush.msra.mxu0 0.0
    %143 = vmatpush.msra.mxu0 0.0
    %144 = vmatpush.msra.mxu0 0.0
    %145 = vmatpush.msra.mxu0 0.0
    %146 = vmatpush.msra.mxu0 0.0
    %147 = vmatpush.msra.mxu0 0.0
    %148 = vmatpush.msra.mxu0 0.0
    %149 = vmatpush.msra.mxu0 0.0
    %150 = vmatpush.msra.mxu0 %v129
    %151 = vmatpush.msra.mxu0 %v128
    %152 = vmatpush.msra.mxu0 %v127
    %153 = vmatpush.msra.mxu0 %v126
    %154 = vmatmul.f32.gmra.mxu0 %v136
    %v155 = vpop.f32.mrf.mxu0
    %v156 = vadd.f32 0.0, %v155
    %157 = vdwg.mxu0
    %v158 = vadd.f32 %v134, %v156
    %v159 = vxor.u32 %v158, 2147483648
    %v160 = vmul.f32 %v159, 1.442695
    %v161 = vpow.pop %v160
    %v162 = vadd.f32 %v161, 1.0
    %v163 = vrcp.pop %v162
    %v164 = vmul.f32 %v162, %v163
    %v165 = vsub.f32 1.0, %v164
    %v166 = vmul.f32 %v163, %v165
    %v167 = vadd.f32 %v163, %v166
    %vm168 = vweird.f32 %v162
    %vm169 = vweird.f32 %v163
    %vm170 = vmor %vm168, %vm169
    %v171 = vsel %vm170, %v163, %v167
    %v172 = vand.u32 2147483647, %v162
    %vm173 = vcmp.eq.f32.partialorder %v172, 8.507059e+37
    %v174 = vand.u32 %v162, 2147483648
    %v175 = vor.u32 1.1754944e-38, %v174
    %v176 = vsel %vm173, %v175, %v171
    %v177 = vmul.f32 1.0, %v176
    %v178 = vtanh.pop %v158
    %v179 = vmul.f32 %v177, 0.0
    %181 = vrot.lane.b32.xlu0 %v178, 64
    %v182 = vpop.permute.xlu0 %181
    %v184 = vmul.f32 %v177, %v182
    %186 = vrot.lane.b32.xlu0 %v184, 32
    %v187 = vpop.permute.xlu0 %186
    %v189 = vadd.f32 %v179, %v187
    %v190 = vtanh.pop %v189
    %192 = vrot.lane.b32.xlu0 %v190, 64
    %v193 = vpop.permute.xlu0 %192
    %v195 = vmul.f32 %v177, %v193
    %vm196 = vcmp.gt.s32.totalorder %v50, 0
    %v197 = vsel %vm196, 1, 0
    %198 = vset.pattern.permute.xlu0 0
    %199 = vperm.xlu0 %198, %v197
    %v200 = vpop.permute.xlu0 %199
    %vm201 = vcmp.eq.s32.totalorder %v200, 1
    %v202 = vsel %vm201, %v195, 0.0
    %204 = vrot.lane.b32.xlu0 %v202, 32
    %v205 = vpop.permute.xlu0 %204
    %vm207 = vcmask 254976
    %208 = vst.msk [vmem:[#allocation4] sm:$0x3] %vm207, %v205
    %v209 = vsel %vm201, %v189, 0.0
    %s210 = scalar_lea.vmem [#allocation3], 14
    %v211 = vld [vmem:[%s210] sm:$0x3]
    %212 = vmatpush.msra.mxu0 0.0
    %213 = vmatpush.msra.mxu0 0.0
    %214 = vmatpush.msra.mxu0 0.0
    %215 = vmatpush.msra.mxu0 0.0
    %216 = vmatpush.msra.mxu0 0.0
    %217 = vmatpush.msra.mxu0 0.0
    %218 = vmatpush.msra.mxu0 0.0
    %219 = vmatpush.msra.mxu0 0.0
    %220 = vmatpush.msra.mxu0 0.0
    %221 = vmatpush.msra.mxu0 0.0
    %222 = vmatpush.msra.mxu0 0.0
    %223 = vmatpush.msra.mxu0 0.0
    %224 = vmatpush.msra.mxu0 %v133
    %225 = vmatpush.msra.mxu0 %v132
    %226 = vmatpush.msra.mxu0 %v131
    %227 = vmatpush.msra.mxu0 %v130
    %228 = vmatmul.f32.gmra.mxu0 %v136
    %v229 = vpop.f32.mrf.mxu0
    %v230 = vadd.f32 0.0, %v229
    %231 = vdwg.mxu0
    %v232 = vadd.f32 %v211, %v230
    %v233 = vxor.u32 %v232, 2147483648
    %v234 = vmul.f32 %v233, 1.442695
    %v235 = vpow.pop %v234
    %v236 = vadd.f32 %v235, 1.0
    %v237 = vrcp.pop %v236
    %v238 = vmul.f32 %v236, %v237
    %v239 = vsub.f32 1.0, %v238
    %v240 = vmul.f32 %v237, %v239
    %v241 = vadd.f32 %v237, %v240
    %vm242 = vweird.f32 %v236
    %vm243 = vweird.f32 %v237
    %vm244 = vmor %vm242, %vm243
    %v245 = vsel %vm244, %v237, %v241
    %v246 = vand.u32 2147483647, %v236
    %vm247 = vcmp.eq.f32.partialorder %v246, 8.507059e+37
    %v248 = vand.u32 %v236, 2147483648
    %v249 = vor.u32 1.1754944e-38, %v248
    %v250 = vsel %vm247, %v249, %v245
    %v251 = vmul.f32 1.0, %v250
    %v252 = vtanh.pop %v232
    %v253 = vmul.f32 %v251, 0.0
    %255 = vrot.lane.b32.xlu0 %v252, 64
    %v256 = vpop.permute.xlu0 %255
    %v258 = vmul.f32 %v251, %v256
    %260 = vrot.lane.b32.xlu0 %v258, 32
    %v261 = vpop.permute.xlu0 %260
    %v263 = vadd.f32 %v253, %v261
    %v264 = vtanh.pop %v263
    %266 = vrot.lane.b32.xlu0 %v264, 64
    %v267 = vpop.permute.xlu0 %266
    %v269 = vmul.f32 %v251, %v267
    %vm270 = vcmp.gt.s32.totalorder %v50, 7
    %v271 = vsel %vm270, 1, 0
    %272 = vset.pattern.permute.xlu0 0
    %273 = vperm.xlu0 %272, %v271
    %v274 = vpop.permute.xlu0 %273
    %vm275 = vcmp.eq.s32.totalorder %v274, 1
    %v276 = vsel %vm275, %v269, 0.0
    %278 = vrot.lane.b32.xlu0 %v276, 32
    %v279 = vpop.permute.xlu0 %278
    %s281 = scalar_lea.vmem [#allocation5], 14
    %282 = vst.msk [vmem:[%s281] sm:$0x3] %vm207, %v279
    %v283 = vsel %vm275, %v263, 0.0
    %s284 = scalar_lea.vmem [#allocation2], 2
    %v285 = vld [vmem:[%s284] sm:$0x3]
    %v286 = vsel %vm61, %v205, 0
    %288 = vmatpush.msra.mxu0 0.0
    %289 = vmatpush.msra.mxu0 0.0
    %290 = vmatpush.msra.mxu0 0.0
    %291 = vmatpush.msra.mxu0 0.0
    %292 = vmatpush.msra.mxu0 0.0
    %293 = vmatpush.msra.mxu0 0.0
    %294 = vmatpush.msra.mxu0 0.0
    %295 = vmatpush.msra.mxu0 0.0
    %296 = vmatpush.msra.mxu0 0.0
    %297 = vmatpush.msra.mxu0 0.0
    %298 = vmatpush.msra.mxu0 0.0
    %299 = vmatpush.msra.mxu0 0.0
    %300 = vmatpush.msra.mxu0 %v129
    %301 = vmatpush.msra.mxu0 %v128
    %302 = vmatpush.msra.mxu0 %v127
    %303 = vmatpush.msra.mxu0 %v126
    %304 = vmatmul.f32.gmra.mxu0 %v286
    %v305 = vpop.f32.mrf.mxu0
    %v306 = vadd.f32 0.0, %v305
    %307 = vdwg.mxu0
    %v308 = vadd.f32 %v285, %v306
    %v309 = vxor.u32 %v308, 2147483648
    %v310 = vmul.f32 %v309, 1.442695
    %v311 = vpow.pop %v310
    %v312 = vadd.f32 %v311, 1.0
    %v313 = vrcp.pop %v312
    %v314 = vmul.f32 %v312, %v313
    %v315 = vsub.f32 1.0, %v314
    %v316 = vmul.f32 %v313, %v315
    %v317 = vadd.f32 %v313, %v316
    %vm318 = vweird.f32 %v312
    %vm319 = vweird.f32 %v313
    %vm320 = vmor %vm318, %vm319
    %v321 = vsel %vm320, %v313, %v317
    %v322 = vand.u32 2147483647, %v312
    %vm323 = vcmp.eq.f32.partialorder %v322, 8.507059e+37
    %v324 = vand.u32 %v312, 2147483648
    %v325 = vor.u32 1.1754944e-38, %v324
    %v326 = vsel %vm323, %v325, %v321
    %v327 = vmul.f32 1.0, %v326
    %v328 = vtanh.pop %v308
    %v329 = vmul.f32 %v327, %v209
    %331 = vrot.lane.b32.xlu0 %v328, 64
    %v332 = vpop.permute.xlu0 %331
    %v334 = vmul.f32 %v327, %v332
    %336 = vrot.lane.b32.xlu0 %v334, 32
    %v337 = vpop.permute.xlu0 %336
    %v339 = vadd.f32 %v329, %v337
    %v340 = vtanh.pop %v339
    %342 = vrot.lane.b32.xlu0 %v340, 64
    %v343 = vpop.permute.xlu0 %342
    %v345 = vmul.f32 %v327, %v343
    %vm346 = vcmp.gt.s32.totalorder %v50, 1
    %v347 = vsel %vm346, 1, 0
    %348 = vset.pattern.permute.xlu0 0
    %349 = vperm.xlu0 %348, %v347
    %v350 = vpop.permute.xlu0 %349
    %vm351 = vcmp.eq.s32.totalorder %v350, 1
    %v352 = vsel %vm351, %v345, 0.0
    %354 = vrot.lane.b32.xlu0 %v352, 32
    %v355 = vpop.permute.xlu0 %354
    %s357 = scalar_lea.vmem [#allocation4], 2
    %358 = vst.msk [vmem:[%s357] sm:$0x3] %vm207, %v355
    %v359 = vsel %vm351, %v345, %v202
    %v360 = vsel %vm351, %v339, %v209
    %s361 = scalar_lea.vmem [#allocation3], 12
    %v362 = vld [vmem:[%s361] sm:$0x3]
    %v363 = vsel %vm61, %v279, 0
    %365 = vmatpush.msra.mxu0 0.0
    %366 = vmatpush.msra.mxu0 0.0
    %367 = vmatpush.msra.mxu0 0.0
    %368 = vmatpush.msra.mxu0 0.0
    %369 = vmatpush.msra.mxu0 0.0
    %370 = vmatpush.msra.mxu0 0.0
    %371 = vmatpush.msra.mxu0 0.0
    %372 = vmatpush.msra.mxu0 0.0
    %373 = vmatpush.msra.mxu0 0.0
    %374 = vmatpush.msra.mxu0 0.0
    %375 = vmatpush.msra.mxu0 0.0
    %376 = vmatpush.msra.mxu0 0.0
    %377 = vmatpush.msra.mxu0 %v133
    %378 = vmatpush.msra.mxu0 %v132
    %379 = vmatpush.msra.mxu0 %v131
    %380 = vmatpush.msra.mxu0 %v130
    %381 = vmatmul.f32.gmra.mxu0 %v363
    %v382 = vpop.f32.mrf.mxu0
    %v383 = vadd.f32 0.0, %v382
    %384 = vdwg.mxu0
    %v385 = vadd.f32 %v362, %v383
    %v386 = vxor.u32 %v385, 2147483648
    %v387 = vmul.f32 %v386, 1.442695
    %v388 = vpow.pop %v387
    %v389 = vadd.f32 %v388, 1.0
    %v390 = vrcp.pop %v389
    %v391 = vmul.f32 %v389, %v390
    %v392 = vsub.f32 1.0, %v391
    %v393 = vmul.f32 %v390, %v392
    %v394 = vadd.f32 %v390, %v393
    %vm395 = vweird.f32 %v389
    %vm396 = vweird.f32 %v390
    %vm397 = vmor %vm395, %vm396
    %v398 = vsel %vm397, %v390, %v394
    %v399 = vand.u32 2147483647, %v389
    %vm400 = vcmp.eq.f32.partialorder %v399, 8.507059e+37
    %v401 = vand.u32 %v389, 2147483648
    %v402 = vor.u32 1.1754944e-38, %v401
    %v403 = vsel %vm400, %v402, %v398
    %v404 = vmul.f32 1.0, %v403
    %v405 = vtanh.pop %v385
    %v406 = vmul.f32 %v404, %v283
    %408 = vrot.lane.b32.xlu0 %v405, 64
    %v409 = vpop.permute.xlu0 %408
    %v411 = vmul.f32 %v404, %v409
    %413 = vrot.lane.b32.xlu0 %v411, 32
    %v414 = vpop.permute.xlu0 %413
    %v416 = vadd.f32 %v406, %v414
    %v417 = vtanh.pop %v416
    %419 = vrot.lane.b32.xlu0 %v417, 64
    %v420 = vpop.permute.xlu0 %419
    %v422 = vmul.f32 %v404, %v420
    %vm423 = vcmp.gt.s32.totalorder %v50, 6
    %v424 = vsel %vm423, 1, 0
    %425 = vset.pattern.permute.xlu0 0
    %426 = vperm.xlu0 %425, %v424
    %v427 = vpop.permute.xlu0 %426
    %vm428 = vcmp.eq.s32.totalorder %v427, 1
    %v429 = vsel %vm428, %v422, 0.0
    %431 = vrot.lane.b32.xlu0 %v429, 32
    %v432 = vpop.permute.xlu0 %431
    %s434 = scalar_lea.vmem [#allocation5], 12
    %435 = vst.msk [vmem:[%s434] sm:$0x3] %vm207, %v432
    %v436 = vsel %vm428, %v422, %v276
    %v437 = vsel %vm428, %v416, %v283
    %s438 = scalar_lea.vmem [#allocation2], 4
    %v439 = vld [vmem:[%s438] sm:$0x3]
    %441 = vrot.lane.b32.xlu0 %v359, 32
    %v442 = vpop.permute.xlu0 %441
    %v443 = vsel %vm61, %v442, 0
    %445 = vmatpush.msra.mxu0 0.0
    %446 = vmatpush.msra.mxu0 0.0
    %447 = vmatpush.msra.mxu0 0.0
    %448 = vmatpush.msra.mxu0 0.0
    %449 = vmatpush.msra.mxu0 0.0
    %450 = vmatpush.msra.mxu0 0.0
    %451 = vmatpush.msra.mxu0 0.0
    %452 = vmatpush.msra.mxu0 0.0
    %453 = vmatpush.msra.mxu0 0.0
    %454 = vmatpush.msra.mxu0 0.0
    %455 = vmatpush.msra.mxu0 0.0
    %456 = vmatpush.msra.mxu0 0.0
    %457 = vmatpush.msra.mxu0 %v129
    %458 = vmatpush.msra.mxu0 %v128
    %459 = vmatpush.msra.mxu0 %v127
    %460 = vmatpush.msra.mxu0 %v126
    %461 = vmatmul.f32.gmra.mxu0 %v443
    %v462 = vpop.f32.mrf.mxu0
    %v463 = vadd.f32 0.0, %v462
    %464 = vdwg.mxu0
    %v465 = vadd.f32 %v439, %v463
    %v466 = vxor.u32 %v465, 2147483648
    %v467 = vmul.f32 %v466, 1.442695
    %v468 = vpow.pop %v467
    %v469 = vadd.f32 %v468, 1.0
    %v470 = vrcp.pop %v469
    %v471 = vmul.f32 %v469, %v470
    %v472 = vsub.f32 1.0, %v471
    %v473 = vmul.f32 %v470, %v472
    %v474 = vadd.f32 %v470, %v473
    %vm475 = vweird.f32 %v469
    %vm476 = vweird.f32 %v470
    %vm477 = vmor %vm475, %vm476
    %v478 = vsel %vm477, %v470, %v474
    %v479 = vand.u32 2147483647, %v469
    %vm480 = vcmp.eq.f32.partialorder %v479, 8.507059e+37
    %v481 = vand.u32 %v469, 2147483648
    %v482 = vor.u32 1.1754944e-38, %v481
    %v483 = vsel %vm480, %v482, %v478
    %v484 = vmul.f32 1.0, %v483
    %v485 = vtanh.pop %v465
    %v486 = vmul.f32 %v484, %v360
    %488 = vrot.lane.b32.xlu0 %v485, 64
    %v489 = vpop.permute.xlu0 %488
    %v491 = vmul.f32 %v484, %v489
    %493 = vrot.lane.b32.xlu0 %v491, 32
    %v494 = vpop.permute.xlu0 %493
    %v496 = vadd.f32 %v486, %v494
    %v497 = vtanh.pop %v496
    %499 = vrot.lane.b32.xlu0 %v497, 64
    %v500 = vpop.permute.xlu0 %499
    %v502 = vmul.f32 %v484, %v500
    %vm503 = vcmp.gt.s32.totalorder %v50, 2
    %v504 = vsel %vm503, 1, 0
    %505 = vset.pattern.permute.xlu0 0
    %506 = vperm.xlu0 %505, %v504
    %v507 = vpop.permute.xlu0 %506
    %vm508 = vcmp.eq.s32.totalorder %v507, 1
    %v509 = vsel %vm508, %v502, 0.0
    %511 = vrot.lane.b32.xlu0 %v509, 32
    %v512 = vpop.permute.xlu0 %511
    %s514 = scalar_lea.vmem [#allocation4], 4
    %515 = vst.msk [vmem:[%s514] sm:$0x3] %vm207, %v512
    %v516 = vsel %vm508, %v502, %v359
    %v517 = vsel %vm508, %v496, %v360
    %s518 = scalar_lea.vmem [#allocation3], 10
    %v519 = vld [vmem:[%s518] sm:$0x3]
    %521 = vrot.lane.b32.xlu0 %v436, 32
    %v522 = vpop.permute.xlu0 %521
    %v523 = vsel %vm61, %v522, 0
    %525 = vmatpush.msra.mxu0 0.0
    %526 = vmatpush.msra.mxu0 0.0
    %527 = vmatpush.msra.mxu0 0.0
    %528 = vmatpush.msra.mxu0 0.0
    %529 = vmatpush.msra.mxu0 0.0
    %530 = vmatpush.msra.mxu0 0.0
    %531 = vmatpush.msra.mxu0 0.0
    %532 = vmatpush.msra.mxu0 0.0
    %533 = vmatpush.msra.mxu0 0.0
    %534 = vmatpush.msra.mxu0 0.0
    %535 = vmatpush.msra.mxu0 0.0
    %536 = vmatpush.msra.mxu0 0.0
    %537 = vmatpush.msra.mxu0 %v133
    %538 = vmatpush.msra.mxu0 %v132
    %539 = vmatpush.msra.mxu0 %v131
    %540 = vmatpush.msra.mxu0 %v130
    %541 = vmatmul.f32.gmra.mxu0 %v523
    %v542 = vpop.f32.mrf.mxu0
    %v543 = vadd.f32 0.0, %v542
    %544 = vdwg.mxu0
    %v545 = vadd.f32 %v519, %v543
    %v546 = vxor.u32 %v545, 2147483648
    %v547 = vmul.f32 %v546, 1.442695
    %v548 = vpow.pop %v547
    %v549 = vadd.f32 %v548, 1.0
    %v550 = vrcp.pop %v549
    %v551 = vmul.f32 %v549, %v550
    %v552 = vsub.f32 1.0, %v551
    %v553 = vmul.f32 %v550, %v552
    %v554 = vadd.f32 %v550, %v553
    %vm555 = vweird.f32 %v549
    %vm556 = vweird.f32 %v550
    %vm557 = vmor %vm555, %vm556
    %v558 = vsel %vm557, %v550, %v554
    %v559 = vand.u32 2147483647, %v549
    %vm560 = vcmp.eq.f32.partialorder %v559, 8.507059e+37
    %v561 = vand.u32 %v549, 2147483648
    %v562 = vor.u32 1.1754944e-38, %v561
    %v563 = vsel %vm560, %v562, %v558
    %v564 = vmul.f32 1.0, %v563
    %v565 = vtanh.pop %v545
    %v566 = vmul.f32 %v564, %v437
    %568 = vrot.lane.b32.xlu0 %v565, 64
    %v569 = vpop.permute.xlu0 %568
    %v571 = vmul.f32 %v564, %v569
    %573 = vrot.lane.b32.xlu0 %v571, 32
    %v574 = vpop.permute.xlu0 %573
    %v576 = vadd.f32 %v566, %v574
    %v577 = vtanh.pop %v576
    %579 = vrot.lane.b32.xlu0 %v577, 64
    %v580 = vpop.permute.xlu0 %579
    %v582 = vmul.f32 %v564, %v580
    %vm583 = vcmp.gt.s32.totalorder %v50, 5
    %v584 = vsel %vm583, 1, 0
    %585 = vset.pattern.permute.xlu0 0
    %586 = vperm.xlu0 %585, %v584
    %v587 = vpop.permute.xlu0 %586
    %vm588 = vcmp.eq.s32.totalorder %v587, 1
    %v589 = vsel %vm588, %v582, 0.0
    %591 = vrot.lane.b32.xlu0 %v589, 32
    %v592 = vpop.permute.xlu0 %591
    %s594 = scalar_lea.vmem [#allocation5], 10
    %595 = vst.msk [vmem:[%s594] sm:$0x3] %vm207, %v592
    %v596 = vsel %vm588, %v582, %v436
    %v597 = vsel %vm588, %v576, %v437
    %s598 = scalar_lea.vmem [#allocation2], 6
    %v599 = vld [vmem:[%s598] sm:$0x3]
    %601 = vrot.lane.b32.xlu0 %v516, 32
    %v602 = vpop.permute.xlu0 %601
    %v603 = vsel %vm61, %v602, 0
    %605 = vmatpush.msra.mxu0 0.0
    %606 = vmatpush.msra.mxu0 0.0
    %607 = vmatpush.msra.mxu0 0.0
    %608 = vmatpush.msra.mxu0 0.0
    %609 = vmatpush.msra.mxu0 0.0
    %610 = vmatpush.msra.mxu0 0.0
    %611 = vmatpush.msra.mxu0 0.0
    %612 = vmatpush.msra.mxu0 0.0
    %613 = vmatpush.msra.mxu0 0.0
    %614 = vmatpush.msra.mxu0 0.0
    %615 = vmatpush.msra.mxu0 0.0
    %616 = vmatpush.msra.mxu0 0.0
    %617 = vmatpush.msra.mxu0 %v129
    %618 = vmatpush.msra.mxu0 %v128
    %619 = vmatpush.msra.mxu0 %v127
    %620 = vmatpush.msra.mxu0 %v126
    %621 = vmatmul.f32.gmra.mxu0 %v603
    %v622 = vpop.f32.mrf.mxu0
    %v623 = vadd.f32 0.0, %v622
    %624 = vdwg.mxu0
    %v625 = vadd.f32 %v599, %v623
    %v626 = vxor.u32 %v625, 2147483648
    %v627 = vmul.f32 %v626, 1.442695
    %v628 = vpow.pop %v627
    %v629 = vadd.f32 %v628, 1.0
    %v630 = vrcp.pop %v629
    %v631 = vmul.f32 %v629, %v630
    %v632 = vsub.f32 1.0, %v631
    %v633 = vmul.f32 %v630, %v632
    %v634 = vadd.f32 %v630, %v633
    %vm635 = vweird.f32 %v629
    %vm636 = vweird.f32 %v630
    %vm637 = vmor %vm635, %vm636
    %v638 = vsel %vm637, %v630, %v634
    %v639 = vand.u32 2147483647, %v629
    %vm640 = vcmp.eq.f32.partialorder %v639, 8.507059e+37
    %v641 = vand.u32 %v629, 2147483648
    %v642 = vor.u32 1.1754944e-38, %v641
    %v643 = vsel %vm640, %v642, %v638
    %v644 = vmul.f32 1.0, %v643
    %v645 = vtanh.pop %v625
    %v646 = vmul.f32 %v644, %v517
    %648 = vrot.lane.b32.xlu0 %v645, 64
    %v649 = vpop.permute.xlu0 %648
    %v651 = vmul.f32 %v644, %v649
    %653 = vrot.lane.b32.xlu0 %v651, 32
    %v654 = vpop.permute.xlu0 %653
    %v656 = vadd.f32 %v646, %v654
    %v657 = vtanh.pop %v656
    %659 = vrot.lane.b32.xlu0 %v657, 64
    %v660 = vpop.permute.xlu0 %659
    %v662 = vmul.f32 %v644, %v660
    %vm663 = vcmp.gt.s32.totalorder %v50, 3
    %v664 = vsel %vm663, 1, 0
    %665 = vset.pattern.permute.xlu0 0
    %666 = vperm.xlu0 %665, %v664
    %v667 = vpop.permute.xlu0 %666
    %vm668 = vcmp.eq.s32.totalorder %v667, 1
    %v669 = vsel %vm668, %v662, 0.0
    %671 = vrot.lane.b32.xlu0 %v669, 32
    %v672 = vpop.permute.xlu0 %671
    %s674 = scalar_lea.vmem [#allocation4], 6
    %675 = vst.msk [vmem:[%s674] sm:$0x3] %vm207, %v672
    %v676 = vsel %vm668, %v662, %v516
    %v677 = vsel %vm668, %v656, %v517
    %s678 = scalar_lea.vmem [#allocation3], 8
    %v679 = vld [vmem:[%s678] sm:$0x3]
    %681 = vrot.lane.b32.xlu0 %v596, 32
    %v682 = vpop.permute.xlu0 %681
    %v683 = vsel %vm61, %v682, 0
    %685 = vmatpush.msra.mxu0 0.0
    %686 = vmatpush.msra.mxu0 0.0
    %687 = vmatpush.msra.mxu0 0.0
    %688 = vmatpush.msra.mxu0 0.0
    %689 = vmatpush.msra.mxu0 0.0
    %690 = vmatpush.msra.mxu0 0.0
    %691 = vmatpush.msra.mxu0 0.0
    %692 = vmatpush.msra.mxu0 0.0
    %693 = vmatpush.msra.mxu0 0.0
    %694 = vmatpush.msra.mxu0 0.0
    %695 = vmatpush.msra.mxu0 0.0
    %696 = vmatpush.msra.mxu0 0.0
    %697 = vmatpush.msra.mxu0 %v133
    %698 = vmatpush.msra.mxu0 %v132
    %699 = vmatpush.msra.mxu0 %v131
    %700 = vmatpush.msra.mxu0 %v130
    %701 = vmatmul.f32.gmra.mxu0 %v683
    %v702 = vpop.f32.mrf.mxu0
    %v703 = vadd.f32 0.0, %v702
    %704 = vdwg.mxu0
    %v705 = vadd.f32 %v679, %v703
    %v706 = vxor.u32 %v705, 2147483648
    %v707 = vmul.f32 %v706, 1.442695
    %v708 = vpow.pop %v707
    %v709 = vadd.f32 %v708, 1.0
    %v710 = vrcp.pop %v709
    %v711 = vmul.f32 %v709, %v710
    %v712 = vsub.f32 1.0, %v711
    %v713 = vmul.f32 %v710, %v712
    %v714 = vadd.f32 %v710, %v713
    %vm715 = vweird.f32 %v709
    %vm716 = vweird.f32 %v710
    %vm717 = vmor %vm715, %vm716
    %v718 = vsel %vm717, %v710, %v714
    %v719 = vand.u32 2147483647, %v709
    %vm720 = vcmp.eq.f32.partialorder %v719, 8.507059e+37
    %v721 = vand.u32 %v709, 2147483648
    %v722 = vor.u32 1.1754944e-38, %v721
    %v723 = vsel %vm720, %v722, %v718
    %v724 = vmul.f32 1.0, %v723
    %v725 = vtanh.pop %v705
    %v726 = vmul.f32 %v724, %v597
    %728 = vrot.lane.b32.xlu0 %v725, 64
    %v729 = vpop.permute.xlu0 %728
    %v731 = vmul.f32 %v724, %v729
    %733 = vrot.lane.b32.xlu0 %v731, 32
    %v734 = vpop.permute.xlu0 %733
    %v736 = vadd.f32 %v726, %v734
    %v737 = vtanh.pop %v736
    %739 = vrot.lane.b32.xlu0 %v737, 64
    %v740 = vpop.permute.xlu0 %739
    %v742 = vmul.f32 %v724, %v740
    %vm743 = vcmp.gt.s32.totalorder %v50, 4
    %v744 = vsel %vm743, 1, 0
    %745 = vset.pattern.permute.xlu0 0
    %746 = vperm.xlu0 %745, %v744
    %v747 = vpop.permute.xlu0 %746
    %vm748 = vcmp.eq.s32.totalorder %v747, 1
    %v749 = vsel %vm748, %v742, 0.0
    %751 = vrot.lane.b32.xlu0 %v749, 32
    %v752 = vpop.permute.xlu0 %751
    %s754 = scalar_lea.vmem [#allocation5], 8
    %755 = vst.msk [vmem:[%s754] sm:$0x3] %vm207, %v752
    %v756 = vsel %vm748, %v742, %v596
    %v757 = vsel %vm748, %v736, %v597
    %s758 = scalar_lea.vmem [#allocation2], 8
    %v759 = vld [vmem:[%s758] sm:$0x3]
    %761 = vrot.lane.b32.xlu0 %v676, 32
    %v762 = vpop.permute.xlu0 %761
    %v763 = vsel %vm61, %v762, 0
    %765 = vmatpush.msra.mxu0 0.0
    %766 = vmatpush.msra.mxu0 0.0
    %767 = vmatpush.msra.mxu0 0.0
    %768 = vmatpush.msra.mxu0 0.0
    %769 = vmatpush.msra.mxu0 0.0
    %770 = vmatpush.msra.mxu0 0.0
    %771 = vmatpush.msra.mxu0 0.0
    %772 = vmatpush.msra.mxu0 0.0
    %773 = vmatpush.msra.mxu0 0.0
    %774 = vmatpush.msra.mxu0 0.0
    %775 = vmatpush.msra.mxu0 0.0
    %776 = vmatpush.msra.mxu0 0.0
    %777 = vmatpush.msra.mxu0 %v129
    %778 = vmatpush.msra.mxu0 %v128
    %779 = vmatpush.msra.mxu0 %v127
    %780 = vmatpush.msra.mxu0 %v126
    %781 = vmatmul.f32.gmra.mxu0 %v763
    %v782 = vpop.f32.mrf.mxu0
    %v783 = vadd.f32 0.0, %v782
    %784 = vdwg.mxu0
    %v785 = vadd.f32 %v759, %v783
    %v786 = vxor.u32 %v785, 2147483648
    %v787 = vmul.f32 %v786, 1.442695
    %v788 = vpow.pop %v787
    %v789 = vadd.f32 %v788, 1.0
    %v790 = vrcp.pop %v789
    %v791 = vmul.f32 %v789, %v790
    %v792 = vsub.f32 1.0, %v791
    %v793 = vmul.f32 %v790, %v792
    %v794 = vadd.f32 %v790, %v793
    %vm795 = vweird.f32 %v789
    %vm796 = vweird.f32 %v790
    %vm797 = vmor %vm795, %vm796
    %v798 = vsel %vm797, %v790, %v794
    %v799 = vand.u32 2147483647, %v789
    %vm800 = vcmp.eq.f32.partialorder %v799, 8.507059e+37
    %v801 = vand.u32 %v789, 2147483648
    %v802 = vor.u32 1.1754944e-38, %v801
    %v803 = vsel %vm800, %v802, %v798
    %v804 = vmul.f32 1.0, %v803
    %v805 = vtanh.pop %v785
    %v806 = vmul.f32 %v804, %v677
    %808 = vrot.lane.b32.xlu0 %v805, 64
    %v809 = vpop.permute.xlu0 %808
    %v811 = vmul.f32 %v804, %v809
    %813 = vrot.lane.b32.xlu0 %v811, 32
    %v814 = vpop.permute.xlu0 %813
    %v816 = vadd.f32 %v806, %v814
    %v817 = vtanh.pop %v816
    %819 = vrot.lane.b32.xlu0 %v817, 64
    %v820 = vpop.permute.xlu0 %819
    %v822 = vmul.f32 %v804, %v820
    %v823 = vsel %vm748, %v822, 0.0
    %825 = vrot.lane.b32.xlu0 %v823, 32
    %v826 = vpop.permute.xlu0 %825
    %s828 = scalar_lea.vmem [#allocation4], 8
    %829 = vst.msk [vmem:[%s828] sm:$0x3] %vm207, %v826
    %v830 = vsel %vm748, %v822, %v676
    %v831 = vsel %vm748, %v816, %v677
    %s832 = scalar_lea.vmem [#allocation3], 6
    %v833 = vld [vmem:[%s832] sm:$0x3]
    %835 = vrot.lane.b32.xlu0 %v756, 32
    %v836 = vpop.permute.xlu0 %835
    %v837 = vsel %vm61, %v836, 0
    %839 = vmatpush.msra.mxu0 0.0
    %840 = vmatpush.msra.mxu0 0.0
    %841 = vmatpush.msra.mxu0 0.0
    %842 = vmatpush.msra.mxu0 0.0
    %843 = vmatpush.msra.mxu0 0.0
    %844 = vmatpush.msra.mxu0 0.0
    %845 = vmatpush.msra.mxu0 0.0
    %846 = vmatpush.msra.mxu0 0.0
    %847 = vmatpush.msra.mxu0 0.0
    %848 = vmatpush.msra.mxu0 0.0
    %849 = vmatpush.msra.mxu0 0.0
    %850 = vmatpush.msra.mxu0 0.0
    %851 = vmatpush.msra.mxu0 %v133
    %852 = vmatpush.msra.mxu0 %v132
    %853 = vmatpush.msra.mxu0 %v131
    %854 = vmatpush.msra.mxu0 %v130
    %855 = vmatmul.f32.gmra.mxu0 %v837
    %v856 = vpop.f32.mrf.mxu0
    %v857 = vadd.f32 0.0, %v856
    %858 = vdwg.mxu0
    %v859 = vadd.f32 %v833, %v857
    %v860 = vxor.u32 %v859, 2147483648
    %v861 = vmul.f32 %v860, 1.442695
    %v862 = vpow.pop %v861
    %v863 = vadd.f32 %v862, 1.0
    %v864 = vrcp.pop %v863
    %v865 = vmul.f32 %v863, %v864
    %v866 = vsub.f32 1.0, %v865
    %v867 = vmul.f32 %v864, %v866
    %v868 = vadd.f32 %v864, %v867
    %vm869 = vweird.f32 %v863
    %vm870 = vweird.f32 %v864
    %vm871 = vmor %vm869, %vm870
    %v872 = vsel %vm871, %v864, %v868
    %v873 = vand.u32 2147483647, %v863
    %vm874 = vcmp.eq.f32.partialorder %v873, 8.507059e+37
    %v875 = vand.u32 %v863, 2147483648
    %v876 = vor.u32 1.1754944e-38, %v875
    %v877 = vsel %vm874, %v876, %v872
    %v878 = vmul.f32 1.0, %v877
    %v879 = vtanh.pop %v859
    %v880 = vmul.f32 %v878, %v757
    %882 = vrot.lane.b32.xlu0 %v879, 64
    %v883 = vpop.permute.xlu0 %882
    %v885 = vmul.f32 %v878, %v883
    %887 = vrot.lane.b32.xlu0 %v885, 32
    %v888 = vpop.permute.xlu0 %887
    %v890 = vadd.f32 %v880, %v888
    %v891 = vtanh.pop %v890
    %893 = vrot.lane.b32.xlu0 %v891, 64
    %v894 = vpop.permute.xlu0 %893
    %v896 = vmul.f32 %v878, %v894
    %v897 = vsel %vm668, %v896, 0.0
    %899 = vrot.lane.b32.xlu0 %v897, 32
    %v900 = vpop.permute.xlu0 %899
    %s902 = scalar_lea.vmem [#allocation5], 6
    %903 = vst.msk [vmem:[%s902] sm:$0x3] %vm207, %v900
    %v904 = vsel %vm668, %v896, %v756
    %v905 = vsel %vm668, %v890, %v757
    %s906 = scalar_lea.vmem [#allocation2], 10
    %v907 = vld [vmem:[%s906] sm:$0x3]
    %909 = vrot.lane.b32.xlu0 %v830, 32
    %v910 = vpop.permute.xlu0 %909
    %v911 = vsel %vm61, %v910, 0
    %913 = vmatpush.msra.mxu0 0.0
    %914 = vmatpush.msra.mxu0 0.0
    %915 = vmatpush.msra.mxu0 0.0
    %916 = vmatpush.msra.mxu0 0.0
    %917 = vmatpush.msra.mxu0 0.0
    %918 = vmatpush.msra.mxu0 0.0
    %919 = vmatpush.msra.mxu0 0.0
    %920 = vmatpush.msra.mxu0 0.0
    %921 = vmatpush.msra.mxu0 0.0
    %922 = vmatpush.msra.mxu0 0.0
    %923 = vmatpush.msra.mxu0 0.0
    %924 = vmatpush.msra.mxu0 0.0
    %925 = vmatpush.msra.mxu0 %v129
    %926 = vmatpush.msra.mxu0 %v128
    %927 = vmatpush.msra.mxu0 %v127
    %928 = vmatpush.msra.mxu0 %v126
    %929 = vmatmul.f32.gmra.mxu0 %v911
    %v930 = vpop.f32.mrf.mxu0
    %v931 = vadd.f32 0.0, %v930
    %932 = vdwg.mxu0
    %v933 = vadd.f32 %v907, %v931
    %v934 = vxor.u32 %v933, 2147483648
    %v935 = vmul.f32 %v934, 1.442695
    %v936 = vpow.pop %v935
    %v937 = vadd.f32 %v936, 1.0
    %v938 = vrcp.pop %v937
    %v939 = vmul.f32 %v937, %v938
    %v940 = vsub.f32 1.0, %v939
    %v941 = vmul.f32 %v938, %v940
    %v942 = vadd.f32 %v938, %v941
    %vm943 = vweird.f32 %v937
    %vm944 = vweird.f32 %v938
    %vm945 = vmor %vm943, %vm944
    %v946 = vsel %vm945, %v938, %v942
    %v947 = vand.u32 2147483647, %v937
    %vm948 = vcmp.eq.f32.partialorder %v947, 8.507059e+37
    %v949 = vand.u32 %v937, 2147483648
    %v950 = vor.u32 1.1754944e-38, %v949
    %v951 = vsel %vm948, %v950, %v946
    %v952 = vmul.f32 1.0, %v951
    %v953 = vtanh.pop %v933
    %v954 = vmul.f32 %v952, %v831
    %956 = vrot.lane.b32.xlu0 %v953, 64
    %v957 = vpop.permute.xlu0 %956
    %v959 = vmul.f32 %v952, %v957
    %961 = vrot.lane.b32.xlu0 %v959, 32
    %v962 = vpop.permute.xlu0 %961
    %v964 = vadd.f32 %v954, %v962
    %v965 = vtanh.pop %v964
    %967 = vrot.lane.b32.xlu0 %v965, 64
    %v968 = vpop.permute.xlu0 %967
    %v970 = vmul.f32 %v952, %v968
    %v971 = vsel %vm588, %v970, 0.0
    %973 = vrot.lane.b32.xlu0 %v971, 32
    %v974 = vpop.permute.xlu0 %973
    %s976 = scalar_lea.vmem [#allocation4], 10
    %977 = vst.msk [vmem:[%s976] sm:$0x3] %vm207, %v974
    %v978 = vsel %vm588, %v970, %v830
    %v979 = vsel %vm588, %v964, %v831
    %s980 = scalar_lea.vmem [#allocation3], 4
    %v981 = vld [vmem:[%s980] sm:$0x3]
    %983 = vrot.lane.b32.xlu0 %v904, 32
    %v984 = vpop.permute.xlu0 %983
    %v985 = vsel %vm61, %v984, 0
    %987 = vmatpush.msra.mxu0 0.0
    %988 = vmatpush.msra.mxu0 0.0
    %989 = vmatpush.msra.mxu0 0.0
    %990 = vmatpush.msra.mxu0 0.0
    %991 = vmatpush.msra.mxu0 0.0
    %992 = vmatpush.msra.mxu0 0.0
    %993 = vmatpush.msra.mxu0 0.0
    %994 = vmatpush.msra.mxu0 0.0
    %995 = vmatpush.msra.mxu0 0.0
    %996 = vmatpush.msra.mxu0 0.0
    %997 = vmatpush.msra.mxu0 0.0
    %998 = vmatpush.msra.mxu0 0.0
    %999 = vmatpush.msra.mxu0 %v133
    %1000 = vmatpush.msra.mxu0 %v132
    %1001 = vmatpush.msra.mxu0 %v131
    %1002 = vmatpush.msra.mxu0 %v130
    %1003 = vmatmul.f32.gmra.mxu0 %v985
    %v1004 = vpop.f32.mrf.mxu0
    %v1005 = vadd.f32 0.0, %v1004
    %1006 = vdwg.mxu0
    %v1007 = vadd.f32 %v981, %v1005
    %v1008 = vxor.u32 %v1007, 2147483648
    %v1009 = vmul.f32 %v1008, 1.442695
    %v1010 = vpow.pop %v1009
    %v1011 = vadd.f32 %v1010, 1.0
    %v1012 = vrcp.pop %v1011
    %v1013 = vmul.f32 %v1011, %v1012
    %v1014 = vsub.f32 1.0, %v1013
    %v1015 = vmul.f32 %v1012, %v1014
    %v1016 = vadd.f32 %v1012, %v1015
    %vm1017 = vweird.f32 %v1011
    %vm1018 = vweird.f32 %v1012
    %vm1019 = vmor %vm1017, %vm1018
    %v1020 = vsel %vm1019, %v1012, %v1016
    %v1021 = vand.u32 2147483647, %v1011
    %vm1022 = vcmp.eq.f32.partialorder %v1021, 8.507059e+37
    %v1023 = vand.u32 %v1011, 2147483648
    %v1024 = vor.u32 1.1754944e-38, %v1023
    %v1025 = vsel %vm1022, %v1024, %v1020
    %v1026 = vmul.f32 1.0, %v1025
    %v1027 = vtanh.pop %v1007
    %v1028 = vmul.f32 %v1026, %v905
    %1030 = vrot.lane.b32.xlu0 %v1027, 64
    %v1031 = vpop.permute.xlu0 %1030
    %v1033 = vmul.f32 %v1026, %v1031
    %1035 = vrot.lane.b32.xlu0 %v1033, 32
    %v1036 = vpop.permute.xlu0 %1035
    %v1038 = vadd.f32 %v1028, %v1036
    %v1039 = vtanh.pop %v1038
    %1041 = vrot.lane.b32.xlu0 %v1039, 64
    %v1042 = vpop.permute.xlu0 %1041
    %v1044 = vmul.f32 %v1026, %v1042
    %v1045 = vsel %vm508, %v1044, 0.0
    %1047 = vrot.lane.b32.xlu0 %v1045, 32
    %v1048 = vpop.permute.xlu0 %1047
    %s1050 = scalar_lea.vmem [#allocation5], 4
    %1051 = vst.msk [vmem:[%s1050] sm:$0x3] %vm207, %v1048
    %v1052 = vsel %vm508, %v1044, %v904
    %v1053 = vsel %vm508, %v1038, %v905
    %s1054 = scalar_lea.vmem [#allocation2], 12
    %v1055 = vld [vmem:[%s1054] sm:$0x3]
    %1057 = vrot.lane.b32.xlu0 %v978, 32
    %v1058 = vpop.permute.xlu0 %1057
    %v1059 = vsel %vm61, %v1058, 0
    %1061 = vmatpush.msra.mxu0 0.0
    %1062 = vmatpush.msra.mxu0 0.0
    %1063 = vmatpush.msra.mxu0 0.0
    %1064 = vmatpush.msra.mxu0 0.0
    %1065 = vmatpush.msra.mxu0 0.0
    %1066 = vmatpush.msra.mxu0 0.0
    %1067 = vmatpush.msra.mxu0 0.0
    %1068 = vmatpush.msra.mxu0 0.0
    %1069 = vmatpush.msra.mxu0 0.0
    %1070 = vmatpush.msra.mxu0 0.0
    %1071 = vmatpush.msra.mxu0 0.0
    %1072 = vmatpush.msra.mxu0 0.0
    %1073 = vmatpush.msra.mxu0 %v129
    %1074 = vmatpush.msra.mxu0 %v128
    %1075 = vmatpush.msra.mxu0 %v127
    %1076 = vmatpush.msra.mxu0 %v126
    %1077 = vmatmul.f32.gmra.mxu0 %v1059
    %v1078 = vpop.f32.mrf.mxu0
    %v1079 = vadd.f32 0.0, %v1078
    %1080 = vdwg.mxu0
    %v1081 = vadd.f32 %v1055, %v1079
    %v1082 = vxor.u32 %v1081, 2147483648
    %v1083 = vmul.f32 %v1082, 1.442695
    %v1084 = vpow.pop %v1083
    %v1085 = vadd.f32 %v1084, 1.0
    %v1086 = vrcp.pop %v1085
    %v1087 = vmul.f32 %v1085, %v1086
    %v1088 = vsub.f32 1.0, %v1087
    %v1089 = vmul.f32 %v1086, %v1088
    %v1090 = vadd.f32 %v1086, %v1089
    %vm1091 = vweird.f32 %v1085
    %vm1092 = vweird.f32 %v1086
    %vm1093 = vmor %vm1091, %vm1092
    %v1094 = vsel %vm1093, %v1086, %v1090
    %v1095 = vand.u32 2147483647, %v1085
    %vm1096 = vcmp.eq.f32.partialorder %v1095, 8.507059e+37
    %v1097 = vand.u32 %v1085, 2147483648
    %v1098 = vor.u32 1.1754944e-38, %v1097
    %v1099 = vsel %vm1096, %v1098, %v1094
    %v1100 = vmul.f32 1.0, %v1099
    %v1101 = vtanh.pop %v1081
    %v1102 = vmul.f32 %v1100, %v979
    %1104 = vrot.lane.b32.xlu0 %v1101, 64
    %v1105 = vpop.permute.xlu0 %1104
    %v1107 = vmul.f32 %v1100, %v1105
    %1109 = vrot.lane.b32.xlu0 %v1107, 32
    %v1110 = vpop.permute.xlu0 %1109
    %v1112 = vadd.f32 %v1102, %v1110
    %v1113 = vtanh.pop %v1112
    %1115 = vrot.lane.b32.xlu0 %v1113, 64
    %v1116 = vpop.permute.xlu0 %1115
    %v1118 = vmul.f32 %v1100, %v1116
    %v1119 = vsel %vm428, %v1118, 0.0
    %1121 = vrot.lane.b32.xlu0 %v1119, 32
    %v1122 = vpop.permute.xlu0 %1121
    %s1124 = scalar_lea.vmem [#allocation4], 12
    %1125 = vst.msk [vmem:[%s1124] sm:$0x3] %vm207, %v1122
    %v1126 = vsel %vm428, %v1118, %v978
    %v1127 = vsel %vm428, %v1112, %v979
    %s1128 = scalar_lea.vmem [#allocation3], 2
    %v1129 = vld [vmem:[%s1128] sm:$0x3]
    %1131 = vrot.lane.b32.xlu0 %v1052, 32
    %v1132 = vpop.permute.xlu0 %1131
    %v1133 = vsel %vm61, %v1132, 0
    %1135 = vmatpush.msra.mxu0 0.0
    %1136 = vmatpush.msra.mxu0 0.0
    %1137 = vmatpush.msra.mxu0 0.0
    %1138 = vmatpush.msra.mxu0 0.0
    %1139 = vmatpush.msra.mxu0 0.0
    %1140 = vmatpush.msra.mxu0 0.0
    %1141 = vmatpush.msra.mxu0 0.0
    %1142 = vmatpush.msra.mxu0 0.0
    %1143 = vmatpush.msra.mxu0 0.0
    %1144 = vmatpush.msra.mxu0 0.0
    %1145 = vmatpush.msra.mxu0 0.0
    %1146 = vmatpush.msra.mxu0 0.0
    %1147 = vmatpush.msra.mxu0 %v133
    %1148 = vmatpush.msra.mxu0 %v132
    %1149 = vmatpush.msra.mxu0 %v131
    %1150 = vmatpush.msra.mxu0 %v130
    %1151 = vmatmul.f32.gmra.mxu0 %v1133
    %v1152 = vpop.f32.mrf.mxu0
    %v1153 = vadd.f32 0.0, %v1152
    %1154 = vdwg.mxu0
    %v1155 = vadd.f32 %v1129, %v1153
    %v1156 = vxor.u32 %v1155, 2147483648
    %v1157 = vmul.f32 %v1156, 1.442695
    %v1158 = vpow.pop %v1157
    %v1159 = vadd.f32 %v1158, 1.0
    %v1160 = vrcp.pop %v1159
    %v1161 = vmul.f32 %v1159, %v1160
    %v1162 = vsub.f32 1.0, %v1161
    %v1163 = vmul.f32 %v1160, %v1162
    %v1164 = vadd.f32 %v1160, %v1163
    %vm1165 = vweird.f32 %v1159
    %vm1166 = vweird.f32 %v1160
    %vm1167 = vmor %vm1165, %vm1166
    %v1168 = vsel %vm1167, %v1160, %v1164
    %v1169 = vand.u32 2147483647, %v1159
    %vm1170 = vcmp.eq.f32.partialorder %v1169, 8.507059e+37
    %v1171 = vand.u32 %v1159, 2147483648
    %v1172 = vor.u32 1.1754944e-38, %v1171
    %v1173 = vsel %vm1170, %v1172, %v1168
    %v1174 = vmul.f32 1.0, %v1173
    %v1175 = vtanh.pop %v1155
    %v1176 = vmul.f32 %v1174, %v1053
    %1178 = vrot.lane.b32.xlu0 %v1175, 64
    %v1179 = vpop.permute.xlu0 %1178
    %v1181 = vmul.f32 %v1174, %v1179
    %1183 = vrot.lane.b32.xlu0 %v1181, 32
    %v1184 = vpop.permute.xlu0 %1183
    %v1186 = vadd.f32 %v1176, %v1184
    %v1187 = vtanh.pop %v1186
    %1189 = vrot.lane.b32.xlu0 %v1187, 64
    %v1190 = vpop.permute.xlu0 %1189
    %v1192 = vmul.f32 %v1174, %v1190
    %v1193 = vsel %vm351, %v1192, 0.0
    %1195 = vrot.lane.b32.xlu0 %v1193, 32
    %v1196 = vpop.permute.xlu0 %1195
    %s1198 = scalar_lea.vmem [#allocation5], 2
    %1199 = vst.msk [vmem:[%s1198] sm:$0x3] %vm207, %v1196
    %v1200 = vsel %vm351, %v1192, %v1052
    %v1201 = vsel %vm351, %v1186, %v1053
    %s1202 = scalar_lea.vmem [#allocation2], 14
    %v1203 = vld [vmem:[%s1202] sm:$0x3]
    %1205 = vrot.lane.b32.xlu0 %v1126, 32
    %v1206 = vpop.permute.xlu0 %1205
    %v1207 = vsel %vm61, %v1206, 0
    %1209 = vmatpush.msra.mxu0 0.0
    %1210 = vmatpush.msra.mxu0 0.0
    %1211 = vmatpush.msra.mxu0 0.0
    %1212 = vmatpush.msra.mxu0 0.0
    %1213 = vmatpush.msra.mxu0 0.0
    %1214 = vmatpush.msra.mxu0 0.0
    %1215 = vmatpush.msra.mxu0 0.0
    %1216 = vmatpush.msra.mxu0 0.0
    %1217 = vmatpush.msra.mxu0 0.0
    %1218 = vmatpush.msra.mxu0 0.0
    %1219 = vmatpush.msra.mxu0 0.0
    %1220 = vmatpush.msra.mxu0 0.0
    %1221 = vmatpush.msra.mxu0 %v129
    %1222 = vmatpush.msra.mxu0 %v128
    %1223 = vmatpush.msra.mxu0 %v127
    %1224 = vmatpush.msra.mxu0 %v126
    %1225 = vmatmul.f32.gmra.mxu0 %v1207
    %v1226 = vpop.f32.mrf.mxu0
    %v1227 = vadd.f32 0.0, %v1226
    %1228 = vdwg.mxu0
    %v1229 = vadd.f32 %v1203, %v1227
    %v1230 = vxor.u32 %v1229, 2147483648
    %v1231 = vmul.f32 %v1230, 1.442695
    %v1232 = vpow.pop %v1231
    %v1233 = vadd.f32 %v1232, 1.0
    %v1234 = vrcp.pop %v1233
    %v1235 = vmul.f32 %v1233, %v1234
    %v1236 = vsub.f32 1.0, %v1235
    %v1237 = vmul.f32 %v1234, %v1236
    %v1238 = vadd.f32 %v1234, %v1237
    %vm1239 = vweird.f32 %v1233
    %vm1240 = vweird.f32 %v1234
    %vm1241 = vmor %vm1239, %vm1240
    %v1242 = vsel %vm1241, %v1234, %v1238
    %v1243 = vand.u32 2147483647, %v1233
    %vm1244 = vcmp.eq.f32.partialorder %v1243, 8.507059e+37
    %v1245 = vand.u32 %v1233, 2147483648
    %v1246 = vor.u32 1.1754944e-38, %v1245
    %v1247 = vsel %vm1244, %v1246, %v1242
    %v1248 = vmul.f32 1.0, %v1247
    %v1249 = vtanh.pop %v1229
    %v1250 = vmul.f32 %v1248, %v1127
    %1252 = vrot.lane.b32.xlu0 %v1249, 64
    %v1253 = vpop.permute.xlu0 %1252
    %v1255 = vmul.f32 %v1248, %v1253
    %1257 = vrot.lane.b32.xlu0 %v1255, 32
    %v1258 = vpop.permute.xlu0 %1257
    %v1260 = vadd.f32 %v1250, %v1258
    %v1261 = vtanh.pop %v1260
    %1263 = vrot.lane.b32.xlu0 %v1261, 64
    %v1264 = vpop.permute.xlu0 %1263
    %v1266 = vmul.f32 %v1248, %v1264
    %v1267 = vsel %vm275, %v1266, 0.0
    %1269 = vrot.lane.b32.xlu0 %v1267, 32
    %v1270 = vpop.permute.xlu0 %1269
    %s1272 = scalar_lea.vmem [#allocation4], 14
    %1273 = vst.msk [vmem:[%s1272] sm:$0x3] %vm207, %v1270
    %v1274 = vsel %vm275, %v1266, %v1126
    %v1275 = vld [vmem:[#allocation3] sm:$0x3]
    %1277 = vrot.lane.b32.xlu0 %v1200, 32
    %v1278 = vpop.permute.xlu0 %1277
    %v1279 = vsel %vm61, %v1278, 0
    %1281 = vmatpush.msra.mxu0 0.0
    %1282 = vmatpush.msra.mxu0 0.0
    %1283 = vmatpush.msra.mxu0 0.0
    %1284 = vmatpush.msra.mxu0 0.0
    %1285 = vmatpush.msra.mxu0 0.0
    %1286 = vmatpush.msra.mxu0 0.0
    %1287 = vmatpush.msra.mxu0 0.0
    %1288 = vmatpush.msra.mxu0 0.0
    %1289 = vmatpush.msra.mxu0 0.0
    %1290 = vmatpush.msra.mxu0 0.0
    %1291 = vmatpush.msra.mxu0 0.0
    %1292 = vmatpush.msra.mxu0 0.0
    %1293 = vmatpush.msra.mxu0 %v133
    %1294 = vmatpush.msra.mxu0 %v132
    %1295 = vmatpush.msra.mxu0 %v131
    %1296 = vmatpush.msra.mxu0 %v130
    %1297 = vmatmul.f32.gmra.mxu0 %v1279
    %v1298 = vpop.f32.mrf.mxu0
    %v1299 = vadd.f32 0.0, %v1298
    %1300 = vdwg.mxu0
    %v1301 = vadd.f32 %v1275, %v1299
    %v1302 = vxor.u32 %v1301, 2147483648
    %v1303 = vmul.f32 %v1302, 1.442695
    %v1304 = vpow.pop %v1303
    %v1305 = vadd.f32 %v1304, 1.0
    %v1306 = vrcp.pop %v1305
    %v1307 = vmul.f32 %v1305, %v1306
    %v1308 = vsub.f32 1.0, %v1307
    %v1309 = vmul.f32 %v1306, %v1308
    %v1310 = vadd.f32 %v1306, %v1309
    %vm1311 = vweird.f32 %v1305
    %vm1312 = vweird.f32 %v1306
    %vm1313 = vmor %vm1311, %vm1312
    %v1314 = vsel %vm1313, %v1306, %v1310
    %v1315 = vand.u32 2147483647, %v1305
    %vm1316 = vcmp.eq.f32.partialorder %v1315, 8.507059e+37
    %v1317 = vand.u32 %v1305, 2147483648
    %v1318 = vor.u32 1.1754944e-38, %v1317
    %v1319 = vsel %vm1316, %v1318, %v1314
    %v1320 = vmul.f32 1.0, %v1319
    %v1321 = vtanh.pop %v1301
    %v1322 = vmul.f32 %v1320, %v1201
    %1324 = vrot.lane.b32.xlu0 %v1321, 64
    %v1325 = vpop.permute.xlu0 %1324
    %v1327 = vmul.f32 %v1320, %v1325
    %1329 = vrot.lane.b32.xlu0 %v1327, 32
    %v1330 = vpop.permute.xlu0 %1329
    %v1332 = vadd.f32 %v1322, %v1330
    %v1333 = vtanh.pop %v1332
    %1335 = vrot.lane.b32.xlu0 %v1333, 64
    %v1336 = vpop.permute.xlu0 %1335
    %v1338 = vmul.f32 %v1320, %v1336
    %v1339 = vsel %vm201, %v1338, 0.0
    %1341 = vrot.lane.b32.xlu0 %v1339, 32
    %v1342 = vpop.permute.xlu0 %1341
    %1344 = vst.msk [vmem:[#allocation5] sm:$0x3] %vm207, %v1342
    %v1345 = vsel %vm201, %v1338, %v1200
    %v1346 = vld [vmem:[#allocation4] sm:$0xff]
    %v1347 = vld [vmem:[#allocation4 + $0x8] sm:$0xff]
    %v1348 = vld [vmem:[%s8] sm:$0xff]
    %v1349 = vld [vmem:[%s8 + $0x8] sm:$0xff]
    %v1350 = vld [vmem:[%s8 + $0x10] sm:$0xff]
    %v1351 = vld [vmem:[%s8 + $0x18] sm:$0xff]
    %v1352 = vld [vmem:[#allocation5] sm:$0xff]
    %v1353 = vld [vmem:[#allocation5 + $0x8] sm:$0xff]
    %v1354 = vld [vmem:[%s9] sm:$0xff]
    %v1355 = vld [vmem:[%s9 + $0x8] sm:$0xff]
    %v1356 = vld [vmem:[%s9 + $0x10] sm:$0xff]
    %v1357 = vld [vmem:[%s9 + $0x18] sm:$0xff]
    %v1359 = vsel %vm61, %v1352, 0
    %v1362 = vsel %vm61, %v1353, 0
    %1364 = vmatpush.msra.mxu0 0.0
    %1365 = vmatpush.msra.mxu0 0.0
    %1366 = vmatpush.msra.mxu0 0.0
    %1367 = vmatpush.msra.mxu0 0.0
    %1368 = vmatpush.msra.mxu0 0.0
    %1369 = vmatpush.msra.mxu0 0.0
    %1370 = vmatpush.msra.mxu0 0.0
    %1371 = vmatpush.msra.mxu0 0.0
    %1372 = vmatpush.msra.mxu0 0.0
    %1373 = vmatpush.msra.mxu0 0.0
    %1374 = vmatpush.msra.mxu0 0.0
    %1375 = vmatpush.msra.mxu0 0.0
    %1376 = vmatpush.msra.mxu0 %v1357
    %1377 = vmatpush.msra.mxu0 %v1356
    %1378 = vmatpush.msra.mxu0 %v1355
    %1379 = vmatpush.msra.mxu0 %v1354
    %1380 = vmatmul.f32.gmra.mxu0 %v1359
    %v1381 = vpop.f32.mrf.mxu0
    %v1382 = vadd.f32 0.0, %v1381
    %1383 = vmatmul.f32.gmra.mxu0 %v1362
    %v1384 = vpop.f32.mrf.mxu0
    %v1385 = vadd.f32 0.0, %v1384
    %1386 = vdwg.mxu0
    %v1388 = vsel %vm61, %v1346, 0
    %v1391 = vsel %vm61, %v1347, 0
    %1393 = vmatpush.msra.mxu0 0.0
    %1394 = vmatpush.msra.mxu0 0.0
    %1395 = vmatpush.msra.mxu0 0.0
    %1396 = vmatpush.msra.mxu0 0.0
    %1397 = vmatpush.msra.mxu0 0.0
    %1398 = vmatpush.msra.mxu0 0.0
    %1399 = vmatpush.msra.mxu0 0.0
    %1400 = vmatpush.msra.mxu0 0.0
    %1401 = vmatpush.msra.mxu0 0.0
    %1402 = vmatpush.msra.mxu0 0.0
    %1403 = vmatpush.msra.mxu0 0.0
    %1404 = vmatpush.msra.mxu0 0.0
    %1405 = vmatpush.msra.mxu0 %v1351
    %1406 = vmatpush.msra.mxu0 %v1350
    %1407 = vmatpush.msra.mxu0 %v1349
    %1408 = vmatpush.msra.mxu0 %v1348
    %1409 = vmatmul.f32.gmra.mxu0 %v1388
    %v1410 = vpop.f32.mrf.mxu0
    %v1411 = vadd.f32 %v1382, %v1410
    %1412 = vmatmul.f32.gmra.mxu0 %v1391
    %v1413 = vpop.f32.mrf.mxu0
    %v1414 = vadd.f32 %v1385, %v1413
    %1415 = vdwg.mxu0
    %v1416 = vld [vmem:[%s10] sm:$0x1]
    %v1418 = vperm.slane %v1416, 0
    %v1420 = vadd.f32 %v1411, %v1418
    %v1421 = vadd.f32 %v1414, %v1418
    %vm1422 = vcmask 130048
    %1423 = vst.msk [vmem:[%s14] sm:$0xff] %vm1422, %v1420
    %1424 = vst.msk [vmem:[%s14 + $0x8] sm:$0xff] %vm1422, %v1421
    %v1425 = vld [vmem:[%s11] sm:$0xff]
    %v1426 = vld [vmem:[%s11 + $0x8] sm:$0xff]
    %v1427 = vld [vmem:[%s11 + $0x10] sm:$0xff]
    %v1428 = vld [vmem:[%s11 + $0x18] sm:$0xff]
    %v1429 = vld [vmem:[%s12] sm:$0xff]
    %v1430 = vld [vmem:[%s12 + $0x8] sm:$0xff]
    %v1431 = vld [vmem:[%s12 + $0x10] sm:$0xff]
    %v1432 = vld [vmem:[%s12 + $0x18] sm:$0xff]
    %1434 = vrot.lane.b32.xlu0 %v1345, 32
    %v1435 = vpop.permute.xlu0 %1434
    %v1436 = vsel %vm61, %v1435, 0
    %1438 = vmatpush.msra.mxu0 0.0
    %1439 = vmatpush.msra.mxu0 0.0
    %1440 = vmatpush.msra.mxu0 0.0
    %1441 = vmatpush.msra.mxu0 0.0
    %1442 = vmatpush.msra.mxu0 0.0
    %1443 = vmatpush.msra.mxu0 0.0
    %1444 = vmatpush.msra.mxu0 0.0
    %1445 = vmatpush.msra.mxu0 0.0
    %1446 = vmatpush.msra.mxu0 0.0
    %1447 = vmatpush.msra.mxu0 0.0
    %1448 = vmatpush.msra.mxu0 0.0
    %1449 = vmatpush.msra.mxu0 0.0
    %1450 = vmatpush.msra.mxu0 %v1432
    %1451 = vmatpush.msra.mxu0 %v1431
    %1452 = vmatpush.msra.mxu0 %v1430
    %1453 = vmatpush.msra.mxu0 %v1429
    %1454 = vmatmul.f32.gmra.mxu0 %v1436
    %v1455 = vpop.f32.mrf.mxu0
    %v1456 = vadd.f32 0.0, %v1455
    %1457 = vdwg.mxu0
    %1459 = vrot.lane.b32.xlu0 %v1274, 32
    %v1460 = vpop.permute.xlu0 %1459
    %v1461 = vsel %vm61, %v1460, 0
    %1463 = vmatpush.msra.mxu0 0.0
    %1464 = vmatpush.msra.mxu0 0.0
    %1465 = vmatpush.msra.mxu0 0.0
    %1466 = vmatpush.msra.mxu0 0.0
    %1467 = vmatpush.msra.mxu0 0.0
    %1468 = vmatpush.msra.mxu0 0.0
    %1469 = vmatpush.msra.mxu0 0.0
    %1470 = vmatpush.msra.mxu0 0.0
    %1471 = vmatpush.msra.mxu0 0.0
    %1472 = vmatpush.msra.mxu0 0.0
    %1473 = vmatpush.msra.mxu0 0.0
    %1474 = vmatpush.msra.mxu0 0.0
    %1475 = vmatpush.msra.mxu0 %v1428
    %1476 = vmatpush.msra.mxu0 %v1427
    %1477 = vmatpush.msra.mxu0 %v1426
    %1478 = vmatpush.msra.mxu0 %v1425
    %1479 = vmatmul.f32.gmra.mxu0 %v1461
    %v1480 = vpop.f32.mrf.mxu0
    %v1481 = vadd.f32 %v1456, %v1480
    %1482 = vdwg.mxu0
    %v1483 = vld [vmem:[%s13] sm:$0x1]
    %v1485 = vperm.slane %v1483, 0
    %v1487 = vadd.f32 %v1481, %v1485
    %vm1488 = vcmask 58368
    %1489 = vst.msk [vmem:[#allocation6] sm:$0x3] %vm1488, %v1487
    // Predicated region
    $region58: #{model_ias_forward.1} parent=1 // pred_check
      _
    $region59: #{model_ias_forward.1} parent=1 // pred_check_branch
      %1491 = sbr.rel (0) target = $region61
    $region60: #{model_ias_forward.1} parent=1 // pred_region
      _
    $region61: #{model_ias_forward.1} parent=1 // pred_fallthru
      _
    // Predicated region
    $region62: #{model_ias_forward.1} parent=1 // pred_check
      _
    $region63: #{model_ias_forward.1} parent=1 // pred_check_branch
      %1493 = sbr.rel (0) target = $region65
    $region64: #{model_ias_forward.1} parent=1 // pred_region
      %1495 = vsyncadd [#allocation7], 0
      %s1497 = sshll.u32 [#allocation6], 4
      %s1498 = int_to_ptr.vmem [resolvable:$true] %s1497
      %s1499 = sshll.u32 %s15, 4
      %s1500 = int_to_ptr.hbm [resolvable:$true] %s1499
      %1502 = dma.vmem_to_hbm [thread:$0]  %s1498, 32, %s1500, [#allocation7]
    $region65: #{model_ias_forward.1} parent=1 // pred_fallthru
      _
    // Predicated region
    $region66: #{model_ias_forward.1} parent=1 // pred_check
      _
    $region67: #{model_ias_forward.1} parent=1 // pred_check_branch
      %1504 = sbr.rel (0) target = $region69
    $region68: #{model_ias_forward.1} parent=1 // pred_region
      _
    $region69: #{model_ias_forward.1} parent=1 // pred_fallthru
      _
    // Predicated region
    $region70: #{model_ias_forward.1} parent=1 // pred_check
      _
    $region71: #{model_ias_forward.1} parent=1 // pred_check_branch
      %1506 = sbr.rel (0) target = $region73
    $region72: #{model_ias_forward.1} parent=1 // pred_region
      %1508 = dma.done [#allocation7], 32
    $region73: #{model_ias_forward.1} parent=1 // pred_fallthru
      _
    %1509 = vsyncpa [#allocation7], 1

</llo_original>
